<compile_context>
chip_gen: v7x
topology: tpu7x:2x2x1
jax: 0.10.0
libtpu: 0.0.40
codegen_flags: <defaults>
</compile_context>

<pallas_src>
import jax
import jax.numpy as jnp
from jax import lax
from jax.experimental import pallas as pl
from jax.experimental.pallas import tpu as pltpu


def _conv1x1_bn_kernel(x_ref, w_ref, gamma_ref, beta_ref, o_ref):
    # x_ref:     [M, Cin]      f32  (cast to bf16 in-kernel for the MXU)
    # w_ref:     [Cin, Cout]   bf16 (pre-laid-out outside the hot path)
    # gamma_ref: [1, Cout]     f32
    # beta_ref:  [1, Cout]     f32
    # o_ref:     [M, Cout]     f32
    eps = 1e-3
    m = x_ref.shape[0]
    inv_m = 1.0 / m

    # 1x1 conv == matmul on the MXU (bf16 operands, f32 accumulation).
    x = x_ref[...].astype(jnp.bfloat16)
    y = jnp.dot(x, w_ref[...], preferred_element_type=jnp.float32)   # [M, Cout] f32

    # BatchNorm (training mode): per-channel batch stats over the M rows,
    # single pass (sum / sum of squares), clamped variance.
    sum_y = jnp.sum(y, axis=0, keepdims=True)                        # [1, Cout]
    sum_y2 = jnp.sum(y * y, axis=0, keepdims=True)                   # [1, Cout]
    mean = sum_y * inv_m
    var = jnp.maximum(sum_y2 * inv_m - mean * mean, 0.0)             # biased variance
    inv_std = lax.rsqrt(var + eps)

    # Folded affine: one multiply-add sweep over y.
    scale = gamma_ref[...] * inv_std                                 # [1, Cout]
    shift = beta_ref[...] - mean * scale                             # [1, Cout]
    o_ref[...] = (y * scale + shift).astype(o_ref.dtype)


def prepare_params(w_oi, gamma, beta):
    """One-time (out-of-hot-path) parameter layout:
       w_oi [Cout, Cin] f32  ->  w_mat [Cin, Cout] bf16; gamma/beta -> [1, Cout] f32."""
    cout = w_oi.shape[0]
    w_mat = jnp.transpose(w_oi, (1, 0)).astype(jnp.bfloat16)
    gamma2 = gamma.reshape(1, cout).astype(jnp.float32)
    beta2 = beta.reshape(1, cout).astype(jnp.float32)
    return w_mat, gamma2, beta2


def conv1x1_bn_nhwc(x_nhwc, w_mat, gamma2, beta2):
    """Hot path. x_nhwc: [N, H, W, Cin] f32 (NHWC end-to-end -> reshape only, no transpose).
       w_mat: [Cin, Cout] bf16 (pre-laid-out). Returns [N, H, W, Cout] f32."""
    n, h, w, cin = x_nhwc.shape
    cout = w_mat.shape[1]
    m = n * h * w
    x_mat = x_nhwc.reshape(m, cin)

    out_mat = pl.pallas_call(
        _conv1x1_bn_kernel,
        out_shape=jax.ShapeDtypeStruct((m, cout), jnp.float32),
        # Single grid step: full-array blocks (block == array shape, so the
        # (8,128) divisibility rule does not apply). VMEM footprint ~1.7 MB.
        in_specs=[
            pl.BlockSpec((m, cin), lambda: (0, 0)),
            pl.BlockSpec((cin, cout), lambda: (0, 0)),
            pl.BlockSpec((1, cout), lambda: (0, 0)),
            pl.BlockSpec((1, cout), lambda: (0, 0)),
        ],
        out_specs=pl.BlockSpec((m, cout), lambda: (0, 0)),
        compiler_params=pltpu.CompilerParams(vmem_limit_bytes=16 << 20),
    )(x_mat, w_mat, gamma2, beta2)

    return out_mat.reshape(n, h, w, cout)


def conv1x1_batchnorm(x_nchw, w_oi, gamma, beta):
    """Module-compatible NCHW wrapper (layout plumbing only; in a fused pipeline
       keep NHWC end-to-end and call conv1x1_bn_nhwc directly)."""
    w_mat, gamma2, beta2 = prepare_params(w_oi, gamma, beta)
    x_nhwc = jnp.transpose(x_nchw, (0, 2, 3, 1))
    out_nhwc = conv1x1_bn_nhwc(x_nhwc, w_mat, gamma2, beta2)
    return jnp.transpose(out_nhwc, (0, 3, 1, 2))


def reference(x_nchw, w_oi, gamma, beta, eps=1e-3):
    """Pure-JAX f32 reference (conv1x1 + training-mode BN), for sanity checking."""
    y = jnp.einsum("nchw,oc->nohw", x_nchw, w_oi)
    mean = jnp.mean(y, axis=(0, 2, 3), keepdims=True)
    var = jnp.mean((y - mean) ** 2, axis=(0, 2, 3), keepdims=True)
    return (y - mean) / jnp.sqrt(var + eps) * gamma[None, :, None, None] + beta[None, :, None, None]


if __name__ == "__main__":
    CIN, COUT = 512, 1280          # fixed by the module definition
    N, H, W = 1, 7, 7              # matches the module's [1, 512, 7, 7] input

    key = jax.random.PRNGKey(0)
    kx, kw, kg, kb = jax.random.split(key, 4)

    x = jax.random.normal(kx, (N, CIN, H, W), dtype=jnp.float32)
    w = jax.random.normal(kw, (COUT, CIN), dtype=jnp.float32) * (1.0 / jnp.sqrt(CIN))
    gamma = 1.0 + 0.1 * jax.random.normal(kg, (COUT,), dtype=jnp.float32)
    beta = 0.1 * jax.random.normal(kb, (COUT,), dtype=jnp.float32)

    # Hot-path style usage: params prepared once, activations NHWC.
    w_mat, gamma2, beta2 = prepare_params(w, gamma, beta)
    x_nhwc = jnp.transpose(x, (0, 2, 3, 1))
    out_nhwc = conv1x1_bn_nhwc(x_nhwc, w_mat, gamma2, beta2)
    out_nhwc = jax.block_until_ready(out_nhwc)

    out = jnp.transpose(out_nhwc, (0, 3, 1, 2))   # back to NCHW for comparison only
    ref = reference(x, w, gamma, beta)
    assert out.shape == (N, COUT, H, W), out.shape
    # bf16 MXU operands over a K=512 contraction -> relaxed tolerance vs f32 reference.
    err = float(jnp.max(jnp.abs(out - ref)))
    assert jnp.allclose(out, ref, atol=5e-2, rtol=5e-2), err

    # Also exercise the module-compatible NCHW wrapper once.
    out2 = jax.block_until_ready(conv1x1_batchnorm(x, w, gamma, beta))
    assert jnp.allclose(out2, ref, atol=5e-2, rtol=5e-2)

    print("KERNEL_OK")
</pallas_src>

<mosaic_0001>
module attributes {stable_mosaic.version = 11 : i64} {
  func.func @_conv1x1_bn_kernel(%arg0: memref<49x512xf32, #tpu.memory_space<vmem>>, %arg1: memref<512x1280xbf16, #tpu.memory_space<vmem>>, %arg2: memref<1x1280xf32, #tpu.memory_space<vmem>>, %arg3: memref<1x1280xf32, #tpu.memory_space<vmem>>, %arg4: memref<49x1280xf32, #tpu.memory_space<vmem>>) attributes {dimension_semantics = [], scalar_prefetch = 0 : i64, scratch_operands = 0 : i64, tpu.core_type = #tpu.core_type<tc>} {
    %c0 = arith.constant 0 : index
    %c0_0 = arith.constant 0 : index
    %0 = vector.load %arg0[%c0, %c0_0] : memref<49x512xf32, #tpu.memory_space<vmem>>, vector<49x512xf32>
    %1 = arith.truncf %0 : vector<49x512xf32> to vector<49x512xbf16>
    %c0_1 = arith.constant 0 : index
    %c0_2 = arith.constant 0 : index
    %2 = vector.load %arg1[%c0_1, %c0_2] : memref<512x1280xbf16, #tpu.memory_space<vmem>>, vector<512x1280xbf16>
    %cst = arith.constant dense<0.000000e+00> : vector<49x1280xf32>
    %3 = tpu.matmul %1, %2, %cst {dimension_numbers = #tpu.dot_dimension_numbers<[1], [0], [0], [1], [0, 0, 1, 1], [], []>} : vector<49x512xbf16>, vector<512x1280xbf16>, vector<49x1280xf32> -> vector<49x1280xf32>
    %cst_3 = arith.constant dense<0.000000e+00> : vector<1280xf32>
    %4 = vector.multi_reduction <add>, %3, %cst_3 [0] : vector<49x1280xf32> to vector<1280xf32>
    %5 = vector.shape_cast %4 : vector<1280xf32> to vector<1x1280xf32>
    %6 = arith.mulf %3, %3 : vector<49x1280xf32>
    %cst_4 = arith.constant dense<0.000000e+00> : vector<1280xf32>
    %7 = vector.multi_reduction <add>, %6, %cst_4 [0] : vector<49x1280xf32> to vector<1280xf32>
    %8 = vector.shape_cast %7 : vector<1280xf32> to vector<1x1280xf32>
    %cst_5 = arith.constant 0.0204081628 : f32
    %9 = vector.broadcast %cst_5 : f32 to vector<1x1280xf32>
    %10 = arith.mulf %5, %9 : vector<1x1280xf32>
    %cst_6 = arith.constant 0.0204081628 : f32
    %11 = vector.broadcast %cst_6 : f32 to vector<1x1280xf32>
    %12 = arith.mulf %8, %11 : vector<1x1280xf32>
    %13 = arith.mulf %10, %10 : vector<1x1280xf32>
    %14 = arith.subf %12, %13 : vector<1x1280xf32>
    %cst_7 = arith.constant 0.000000e+00 : f32
    %15 = vector.broadcast %cst_7 : f32 to vector<1x1280xf32>
    %16 = arith.maximumf %14, %15 : vector<1x1280xf32>
    %cst_8 = arith.constant 1.000000e-03 : f32
    %17 = vector.broadcast %cst_8 : f32 to vector<1x1280xf32>
    %18 = arith.addf %16, %17 : vector<1x1280xf32>
    %19 = math.rsqrt %18 : vector<1x1280xf32>
    %c0_9 = arith.constant 0 : index
    %c0_10 = arith.constant 0 : index
    %20 = vector.load %arg2[%c0_9, %c0_10] : memref<1x1280xf32, #tpu.memory_space<vmem>>, vector<1x1280xf32>
    %21 = arith.mulf %20, %19 : vector<1x1280xf32>
    %c0_11 = arith.constant 0 : index
    %c0_12 = arith.constant 0 : index
    %22 = vector.load %arg3[%c0_11, %c0_12] : memref<1x1280xf32, #tpu.memory_space<vmem>>, vector<1x1280xf32>
    %23 = arith.mulf %10, %21 : vector<1x1280xf32>
    %24 = arith.subf %22, %23 : vector<1x1280xf32>
    %25 = vector.broadcast %21 : vector<1x1280xf32> to vector<49x1280xf32>
    %26 = arith.mulf %3, %25 : vector<49x1280xf32>
    %27 = vector.broadcast %24 : vector<1x1280xf32> to vector<49x1280xf32>
    %28 = arith.addf %26, %27 : vector<49x1280xf32>
    %c0_13 = arith.constant 0 : index
    %c0_14 = arith.constant 0 : index
    %29 = vector.load %arg4[%c0_13, %c0_14] : memref<49x1280xf32, #tpu.memory_space<vmem>>, vector<49x1280xf32>
    tpu.vector_store %arg4[%c0_13, %c0_14], %28 {strides = array<i32>} : memref<49x1280xf32, #tpu.memory_space<vmem>>, vector<49x1280xf32>,
    return
  }
}

</mosaic_0001>

<llo_original>
// kernel: tpu_custom_call.1
$region0: #{tpu_custom_call.1}
  #allocation0 [shape = 'u32[]', space=smem, size = 0x4, offset = 0x4, fixed_abs, tag = 'smem constant byte address 0x4 - core index']
  #allocation1 [shape = 'u32[144,128]{1,0:T(1,128)}', space=vmem, size = 0x12000, scoped, tag = 'internal scratch']
  %s0 = inlined_call_operand.hbm [shape: f32[49,512], index: 0, kind: input, shape index: {}]
  %s1 = inlined_call_operand.hbm [shape: bf16[512,1280], index: 1, kind: input, shape index: {}]
  %s2 = inlined_call_operand.hbm [shape: f32[1,1280], index: 2, kind: input, shape index: {}]
  %s3 = inlined_call_operand.hbm [shape: f32[1,1280], index: 3, kind: input, shape index: {}]
  %s4 = inlined_call_operand.hbm [shape: f32[49,1280], index: 4, kind: output, shape index: {}]
  %s5 = sld [smem:[#allocation0]]
  $region42: #{tpu_custom_call.1} parent=0
    _
  %s7 = ssub.s32 1, %s5
  %s8 = scalar_select 0, %s7, %s5
  $region1: #{tpu_custom_call.1} parent=0
    #allocation2 [shape = 'u8[114688]{0}', space=vmem, size = 0x1c000, scoped, tag = 'input window, operand 0, single buffered']
    #allocation3 [shape = 's32[1]{0}', space=sflag, size = 0x4, scoped, tag = 'scoped memory for tpu_custom_call.1']
    #allocation4 [shape = 's32[1]{0}', space=sflag, size = 0x4, scoped, tag = 'scoped memory for tpu_custom_call.1']
    #allocation5 [shape = 'u8[1310720]{0}', space=vmem, size = 0x140000, scoped, tag = 'input window, operand 1, single buffered']
    #allocation6 [shape = 's32[1]{0}', space=sflag, size = 0x4, scoped, tag = 'scoped memory for tpu_custom_call.1']
    #allocation7 [shape = 'u8[5120]{0}', space=vmem, size = 0x1400, scoped, tag = 'input window, operand 2, single buffered']
    #allocation8 [shape = 'u8[5120]{0}', space=vmem, size = 0x1400, scoped, tag = 'input window, operand 3, single buffered']
    #allocation9 [shape = 's32[1]{0}', space=sflag, size = 0x4, scoped, tag = 'scoped memory for tpu_custom_call.1']
    #allocation10 [shape = 'u8[286720]{0}', space=vmem, size = 0x46000, scoped, tag = 'output window, operand 0, single buffered']
    %9 = vsyncpa [#allocation3], 0
    %10 = vsyncpa [#allocation6], 0
    %11 = vsyncpa [#allocation9], 0
    %12 = vsyncpa [#allocation4], 0
    // Predicated region
    $region2: #{tpu_custom_call.1} parent=1 // pred_check
      _
    $region3: #{tpu_custom_call.1} parent=1 // pred_check_branch
      %14 = sbr.rel (0) target = $region5
    $region4: #{tpu_custom_call.1} parent=1 // pred_region
      %s16 = ssub.s32 3584, 3584
      %17 = vsyncadd [#allocation3], %s16
      %s18 = sshll.u32 [#allocation2], 4
      %s19 = int_to_ptr.vmem [resolvable:$true] %s18
      %24 = dma.hbm_to_vmem [thread:$0]  %s0, 3584, %s19, [#allocation3], 512, 512, 32
    $region5: #{tpu_custom_call.1} parent=1 // pred_fallthru
      _
    // Predicated region
    $region6: #{tpu_custom_call.1} parent=1 // pred_check
      _
    $region7: #{tpu_custom_call.1} parent=1 // pred_check_branch
      %26 = sbr.rel (0) target = $region9
    $region8: #{tpu_custom_call.1} parent=1 // pred_region
      %s28 = ssub.s32 40960, 40960
      %29 = vsyncadd [#allocation6], %s28
      %s30 = sshll.u32 [#allocation5], 4
      %s31 = int_to_ptr.vmem [resolvable:$true] %s30
      %36 = dma.hbm_to_vmem [thread:$0]  %s1, 40960, %s31, [#allocation6], 640, 640, 40
    $region9: #{tpu_custom_call.1} parent=1 // pred_fallthru
      _
    // Predicated region
    $region10: #{tpu_custom_call.1} parent=1 // pred_check
      _
    $region11: #{tpu_custom_call.1} parent=1 // pred_check_branch
      %38 = sbr.rel (0) target = $region13
    $region12: #{tpu_custom_call.1} parent=1 // pred_region
      %s40 = ssub.s32 160, 160
      %41 = vsyncadd [#allocation6], %s40
      %s43 = sshll.u32 [#allocation7], 4
      %s44 = int_to_ptr.vmem [resolvable:$true] %s43
      %46 = dma.hbm_to_vmem [thread:$0]  %s2, 160, %s44, [#allocation6]
    $region13: #{tpu_custom_call.1} parent=1 // pred_fallthru
      _
    // Predicated region
    $region14: #{tpu_custom_call.1} parent=1 // pred_check
      _
    $region15: #{tpu_custom_call.1} parent=1 // pred_check_branch
      %48 = sbr.rel (0) target = $region17
    $region16: #{tpu_custom_call.1} parent=1 // pred_region
      %s50 = ssub.s32 160, 160
      %51 = vsyncadd [#allocation9], %s50
      %s53 = sshll.u32 [#allocation8], 4
      %s54 = int_to_ptr.vmem [resolvable:$true] %s53
      %56 = dma.hbm_to_vmem [thread:$0]  %s3, 160, %s54, [#allocation9]
    $region17: #{tpu_custom_call.1} parent=1 // pred_fallthru
      _
    // Predicated region
    $region18: #{tpu_custom_call.1} parent=1 // pred_check
      _
    $region19: #{tpu_custom_call.1} parent=1 // pred_check_branch
      %58 = sbr.rel (0) target = $region21
    $region20: #{tpu_custom_call.1} parent=1 // pred_region
      %59 = dma.done [#allocation3], 3584
    $region21: #{tpu_custom_call.1} parent=1 // pred_fallthru
      _
    // Predicated region
    $region22: #{tpu_custom_call.1} parent=1 // pred_check
      _
    $region23: #{tpu_custom_call.1} parent=1 // pred_check_branch
      %61 = sbr.rel (0) target = $region25
    $region24: #{tpu_custom_call.1} parent=1 // pred_region
      %62 = dma.done [#allocation6], 40960
    $region25: #{tpu_custom_call.1} parent=1 // pred_fallthru
      _
    // Predicated region
    $region26: #{tpu_custom_call.1} parent=1 // pred_check
      _
    $region27: #{tpu_custom_call.1} parent=1 // pred_check_branch
      %64 = sbr.rel (0) target = $region29
    $region28: #{tpu_custom_call.1} parent=1 // pred_region
      %65 = dma.done [#allocation6], 160
    $region29: #{tpu_custom_call.1} parent=1 // pred_fallthru
      _
    // Predicated region
    $region30: #{tpu_custom_call.1} parent=1 // pred_check
      _
    $region31: #{tpu_custom_call.1} parent=1 // pred_check_branch
      %67 = sbr.rel (0) target = $region33
    $region32: #{tpu_custom_call.1} parent=1 // pred_region
      %68 = dma.done [#allocation9], 160
    $region33: #{tpu_custom_call.1} parent=1 // pred_fallthru
      _
    %v69 = vld [vmem:[#allocation2] sm:$0xff]
    %v70 = vld [vmem:[#allocation2 + $0x8] sm:$0xff]
    %v71 = vld [vmem:[#allocation2 + $0x10] sm:$0xff]
    %v72 = vld [vmem:[#allocation2 + $0x18] sm:$0xff]
    %v73 = vld [vmem:[#allocation2 + $0x20] sm:$0xff]
    %v74 = vld [vmem:[#allocation2 + $0x28] sm:$0xff]
    %v75 = vld [vmem:[#allocation2 + $0x30] sm:$0xff]
    %v76 = vld [vmem:[#allocation2 + $0x38] sm:$0xff]
    %v77 = vld [vmem:[#allocation2 + $0x40] sm:$0xff]
    %v78 = vld [vmem:[#allocation2 + $0x48] sm:$0xff]
    %v79 = vld [vmem:[#allocation2 + $0x50] sm:$0xff]
    %v80 = vld [vmem:[#allocation2 + $0x58] sm:$0xff]
    %v81 = vld [vmem:[#allocation2 + $0x60] sm:$0xff]
    %v82 = vld [vmem:[#allocation2 + $0x68] sm:$0xff]
    %v83 = vld [vmem:[#allocation2 + $0x70] sm:$0xff]
    %v84 = vld [vmem:[#allocation2 + $0x78] sm:$0xff]
    %v85 = vld [vmem:[#allocation2 + $0x80] sm:$0xff]
    %v86 = vld [vmem:[#allocation2 + $0x88] sm:$0xff]
    %v87 = vld [vmem:[#allocation2 + $0x90] sm:$0xff]
    %v88 = vld [vmem:[#allocation2 + $0x98] sm:$0xff]
    %v89 = vld [vmem:[#allocation2 + $0xa0] sm:$0xff]
    %v90 = vld [vmem:[#allocation2 + $0xa8] sm:$0xff]
    %v91 = vld [vmem:[#allocation2 + $0xb0] sm:$0xff]
    %v92 = vld [vmem:[#allocation2 + $0xb8] sm:$0xff]
    %v93 = vld [vmem:[#allocation2 + $0xc0] sm:$0x1]
    %v94 = vld [vmem:[#allocation2 + $0xc8] sm:$0x1]
    %v95 = vld [vmem:[#allocation2 + $0xd0] sm:$0x1]
    %v96 = vld [vmem:[#allocation2 + $0xd8] sm:$0x1]
    %v97 = vpack.c.bf16 %v73, %v69
    %v98 = vpack.c.bf16 %v74, %v70
    %v99 = vpack.c.bf16 %v75, %v71
    %v100 = vpack.c.bf16 %v76, %v72
    %v101 = vpack.c.bf16 %v81, %v77
    %v102 = vpack.c.bf16 %v82, %v78
    %v103 = vpack.c.bf16 %v83, %v79
    %v104 = vpack.c.bf16 %v84, %v80
    %v105 = vpack.c.bf16 %v89, %v85
    %v106 = vpack.c.bf16 %v90, %v86
    %v107 = vpack.c.bf16 %v91, %v87
    %v108 = vpack.c.bf16 %v92, %v88
    %v109 = vpack.c.bf16 %v93, %v93
    %v110 = vpack.c.bf16 %v94, %v94
    %v111 = vpack.c.bf16 %v95, %v95
    %v112 = vpack.c.bf16 %v96, %v96
    %v113 = vld [vmem:[#allocation5] sm:$0xff]
    %v114 = vld [vmem:[#allocation5 + $0x8] sm:$0xff]
    %v115 = vld [vmem:[#allocation5 + $0x10] sm:$0xff]
    %v116 = vld [vmem:[#allocation5 + $0x18] sm:$0xff]
    %v117 = vld [vmem:[#allocation5 + $0x20] sm:$0xff]
    %v118 = vld [vmem:[#allocation5 + $0x28] sm:$0xff]
    %v119 = vld [vmem:[#allocation5 + $0x30] sm:$0xff]
    %v120 = vld [vmem:[#allocation5 + $0x38] sm:$0xff]
    %v121 = vld [vmem:[#allocation5 + $0x40] sm:$0xff]
    %v122 = vld [vmem:[#allocation5 + $0x48] sm:$0xff]
    %v123 = vld [vmem:[#allocation5 + $0x50] sm:$0xff]
    %v124 = vld [vmem:[#allocation5 + $0x58] sm:$0xff]
    %v125 = vld [vmem:[#allocation5 + $0x60] sm:$0xff]
    %v126 = vld [vmem:[#allocation5 + $0x68] sm:$0xff]
    %v127 = vld [vmem:[#allocation5 + $0x70] sm:$0xff]
    %v128 = vld [vmem:[#allocation5 + $0x78] sm:$0xff]
    %v129 = vld [vmem:[#allocation5 + $0x80] sm:$0xff]
    %v130 = vld [vmem:[#allocation5 + $0x88] sm:$0xff]
    %v131 = vld [vmem:[#allocation5 + $0x90] sm:$0xff]
    %v132 = vld [vmem:[#allocation5 + $0x98] sm:$0xff]
    %v133 = vld [vmem:[#allocation5 + $0xa0] sm:$0xff]
    %v134 = vld [vmem:[#allocation5 + $0xa8] sm:$0xff]
    %v135 = vld [vmem:[#allocation5 + $0xb0] sm:$0xff]
    %v136 = vld [vmem:[#allocation5 + $0xb8] sm:$0xff]
    %v137 = vld [vmem:[#allocation5 + $0xc0] sm:$0xff]
    %v138 = vld [vmem:[#allocation5 + $0xc8] sm:$0xff]
    %v139 = vld [vmem:[#allocation5 + $0xd0] sm:$0xff]
    %v140 = vld [vmem:[#allocation5 + $0xd8] sm:$0xff]
    %v141 = vld [vmem:[#allocation5 + $0xe0] sm:$0xff]
    %v142 = vld [vmem:[#allocation5 + $0xe8] sm:$0xff]
    %v143 = vld [vmem:[#allocation5 + $0xf0] sm:$0xff]
    %v144 = vld [vmem:[#allocation5 + $0xf8] sm:$0xff]
    %v145 = vld [vmem:[#allocation5 + $0x100] sm:$0xff]
    %v146 = vld [vmem:[#allocation5 + $0x108] sm:$0xff]
    %v147 = vld [vmem:[#allocation5 + $0x110] sm:$0xff]
    %v148 = vld [vmem:[#allocation5 + $0x118] sm:$0xff]
    %v149 = vld [vmem:[#allocation5 + $0x120] sm:$0xff]
    %v150 = vld [vmem:[#allocation5 + $0x128] sm:$0xff]
    %v151 = vld [vmem:[#allocation5 + $0x130] sm:$0xff]
    %v152 = vld [vmem:[#allocation5 + $0x138] sm:$0xff]
    %v153 = vld [vmem:[#allocation5 + $0x140] sm:$0xff]
    %v154 = vld [vmem:[#allocation5 + $0x148] sm:$0xff]
    %v155 = vld [vmem:[#allocation5 + $0x150] sm:$0xff]
    %v156 = vld [vmem:[#allocation5 + $0x158] sm:$0xff]
    %v157 = vld [vmem:[#allocation5 + $0x160] sm:$0xff]
    %v158 = vld [vmem:[#allocation5 + $0x168] sm:$0xff]
    %v159 = vld [vmem:[#allocation5 + $0x170] sm:$0xff]
    %v160 = vld [vmem:[#allocation5 + $0x178] sm:$0xff]
    %v161 = vld [vmem:[#allocation5 + $0x180] sm:$0xff]
    %v162 = vld [vmem:[#allocation5 + $0x188] sm:$0xff]
    %v163 = vld [vmem:[#allocation5 + $0x190] sm:$0xff]
    %v164 = vld [vmem:[#allocation5 + $0x198] sm:$0xff]
    %v165 = vld [vmem:[#allocation5 + $0x1a0] sm:$0xff]
    %v166 = vld [vmem:[#allocation5 + $0x1a8] sm:$0xff]
    %v167 = vld [vmem:[#allocation5 + $0x1b0] sm:$0xff]
    %v168 = vld [vmem:[#allocation5 + $0x1b8] sm:$0xff]
    %v169 = vld [vmem:[#allocation5 + $0x1c0] sm:$0xff]
    %v170 = vld [vmem:[#allocation5 + $0x1c8] sm:$0xff]
    %v171 = vld [vmem:[#allocation5 + $0x1d0] sm:$0xff]
    %v172 = vld [vmem:[#allocation5 + $0x1d8] sm:$0xff]
    %v173 = vld [vmem:[#allocation5 + $0x1e0] sm:$0xff]
    %v174 = vld [vmem:[#allocation5 + $0x1e8] sm:$0xff]
    %v175 = vld [vmem:[#allocation5 + $0x1f0] sm:$0xff]
    %v176 = vld [vmem:[#allocation5 + $0x1f8] sm:$0xff]
    %v177 = vld [vmem:[#allocation5 + $0x200] sm:$0xff]
    %v178 = vld [vmem:[#allocation5 + $0x208] sm:$0xff]
    %v179 = vld [vmem:[#allocation5 + $0x210] sm:$0xff]
    %v180 = vld [vmem:[#allocation5 + $0x218] sm:$0xff]
    %v181 = vld [vmem:[#allocation5 + $0x220] sm:$0xff]
    %v182 = vld [vmem:[#allocation5 + $0x228] sm:$0xff]
    %v183 = vld [vmem:[#allocation5 + $0x230] sm:$0xff]
    %v184 = vld [vmem:[#allocation5 + $0x238] sm:$0xff]
    %v185 = vld [vmem:[#allocation5 + $0x240] sm:$0xff]
    %v186 = vld [vmem:[#allocation5 + $0x248] sm:$0xff]
    %v187 = vld [vmem:[#allocation5 + $0x250] sm:$0xff]
    %v188 = vld [vmem:[#allocation5 + $0x258] sm:$0xff]
    %v189 = vld [vmem:[#allocation5 + $0x260] sm:$0xff]
    %v190 = vld [vmem:[#allocation5 + $0x268] sm:$0xff]
    %v191 = vld [vmem:[#allocation5 + $0x270] sm:$0xff]
    %v192 = vld [vmem:[#allocation5 + $0x278] sm:$0xff]
    %v193 = vld [vmem:[#allocation5 + $0x280] sm:$0xff]
    %v194 = vld [vmem:[#allocation5 + $0x288] sm:$0xff]
    %v195 = vld [vmem:[#allocation5 + $0x290] sm:$0xff]
    %v196 = vld [vmem:[#allocation5 + $0x298] sm:$0xff]
    %v197 = vld [vmem:[#allocation5 + $0x2a0] sm:$0xff]
    %v198 = vld [vmem:[#allocation5 + $0x2a8] sm:$0xff]
    %v199 = vld [vmem:[#allocation5 + $0x2b0] sm:$0xff]
    %v200 = vld [vmem:[#allocation5 + $0x2b8] sm:$0xff]
    %v201 = vld [vmem:[#allocation5 + $0x2c0] sm:$0xff]
    %v202 = vld [vmem:[#allocation5 + $0x2c8] sm:$0xff]
    %v203 = vld [vmem:[#allocation5 + $0x2d0] sm:$0xff]
    %v204 = vld [vmem:[#allocation5 + $0x2d8] sm:$0xff]
    %v205 = vld [vmem:[#allocation5 + $0x2e0] sm:$0xff]
    %v206 = vld [vmem:[#allocation5 + $0x2e8] sm:$0xff]
    %v207 = vld [vmem:[#allocation5 + $0x2f0] sm:$0xff]
    %v208 = vld [vmem:[#allocation5 + $0x2f8] sm:$0xff]
    %v209 = vld [vmem:[#allocation5 + $0x300] sm:$0xff]
    %v210 = vld [vmem:[#allocation5 + $0x308] sm:$0xff]
    %v211 = vld [vmem:[#allocation5 + $0x310] sm:$0xff]
    %v212 = vld [vmem:[#allocation5 + $0x318] sm:$0xff]
    %v213 = vld [vmem:[#allocation5 + $0x320] sm:$0xff]
    %v214 = vld [vmem:[#allocation5 + $0x328] sm:$0xff]
    %v215 = vld [vmem:[#allocation5 + $0x330] sm:$0xff]
    %v216 = vld [vmem:[#allocation5 + $0x338] sm:$0xff]
    %v217 = vld [vmem:[#allocation5 + $0x340] sm:$0xff]
    %v218 = vld [vmem:[#allocation5 + $0x348] sm:$0xff]
    %v219 = vld [vmem:[#allocation5 + $0x350] sm:$0xff]
    %v220 = vld [vmem:[#allocation5 + $0x358] sm:$0xff]
    %v221 = vld [vmem:[#allocation5 + $0x360] sm:$0xff]
    %v222 = vld [vmem:[#allocation5 + $0x368] sm:$0xff]
    %v223 = vld [vmem:[#allocation5 + $0x370] sm:$0xff]
    %v224 = vld [vmem:[#allocation5 + $0x378] sm:$0xff]
    %v225 = vld [vmem:[#allocation5 + $0x380] sm:$0xff]
    %v226 = vld [vmem:[#allocation5 + $0x388] sm:$0xff]
    %v227 = vld [vmem:[#allocation5 + $0x390] sm:$0xff]
    %v228 = vld [vmem:[#allocation5 + $0x398] sm:$0xff]
    %v229 = vld [vmem:[#allocation5 + $0x3a0] sm:$0xff]
    %v230 = vld [vmem:[#allocation5 + $0x3a8] sm:$0xff]
    %v231 = vld [vmem:[#allocation5 + $0x3b0] sm:$0xff]
    %v232 = vld [vmem:[#allocation5 + $0x3b8] sm:$0xff]
    %v233 = vld [vmem:[#allocation5 + $0x3c0] sm:$0xff]
    %v234 = vld [vmem:[#allocation5 + $0x3c8] sm:$0xff]
    %v235 = vld [vmem:[#allocation5 + $0x3d0] sm:$0xff]
    %v236 = vld [vmem:[#allocation5 + $0x3d8] sm:$0xff]
    %v237 = vld [vmem:[#allocation5 + $0x3e0] sm:$0xff]
    %v238 = vld [vmem:[#allocation5 + $0x3e8] sm:$0xff]
    %v239 = vld [vmem:[#allocation5 + $0x3f0] sm:$0xff]
    %v240 = vld [vmem:[#allocation5 + $0x3f8] sm:$0xff]
    %v241 = vld [vmem:[#allocation5 + $0x400] sm:$0xff]
    %v242 = vld [vmem:[#allocation5 + $0x408] sm:$0xff]
    %v243 = vld [vmem:[#allocation5 + $0x410] sm:$0xff]
    %v244 = vld [vmem:[#allocation5 + $0x418] sm:$0xff]
    %v245 = vld [vmem:[#allocation5 + $0x420] sm:$0xff]
    %v246 = vld [vmem:[#allocation5 + $0x428] sm:$0xff]
    %v247 = vld [vmem:[#allocation5 + $0x430] sm:$0xff]
    %v248 = vld [vmem:[#allocation5 + $0x438] sm:$0xff]
    %v249 = vld [vmem:[#allocation5 + $0x440] sm:$0xff]
    %v250 = vld [vmem:[#allocation5 + $0x448] sm:$0xff]
    %v251 = vld [vmem:[#allocation5 + $0x450] sm:$0xff]
    %v252 = vld [vmem:[#allocation5 + $0x458] sm:$0xff]
    %v253 = vld [vmem:[#allocation5 + $0x460] sm:$0xff]
    %v254 = vld [vmem:[#allocation5 + $0x468] sm:$0xff]
    %v255 = vld [vmem:[#allocation5 + $0x470] sm:$0xff]
    %v256 = vld [vmem:[#allocation5 + $0x478] sm:$0xff]
    %v257 = vld [vmem:[#allocation5 + $0x480] sm:$0xff]
    %v258 = vld [vmem:[#allocation5 + $0x488] sm:$0xff]
    %v259 = vld [vmem:[#allocation5 + $0x490] sm:$0xff]
    %v260 = vld [vmem:[#allocation5 + $0x498] sm:$0xff]
    %v261 = vld [vmem:[#allocation5 + $0x4a0] sm:$0xff]
    %v262 = vld [vmem:[#allocation5 + $0x4a8] sm:$0xff]
    %v263 = vld [vmem:[#allocation5 + $0x4b0] sm:$0xff]
    %v264 = vld [vmem:[#allocation5 + $0x4b8] sm:$0xff]
    %v265 = vld [vmem:[#allocation5 + $0x4c0] sm:$0xff]
    %v266 = vld [vmem:[#allocation5 + $0x4c8] sm:$0xff]
    %v267 = vld [vmem:[#allocation5 + $0x4d0] sm:$0xff]
    %v268 = vld [vmem:[#allocation5 + $0x4d8] sm:$0xff]
    %v269 = vld [vmem:[#allocation5 + $0x4e0] sm:$0xff]
    %v270 = vld [vmem:[#allocation5 + $0x4e8] sm:$0xff]
    %v271 = vld [vmem:[#allocation5 + $0x4f0] sm:$0xff]
    %v272 = vld [vmem:[#allocation5 + $0x4f8] sm:$0xff]
    %v273 = vld [vmem:[#allocation5 + $0x500] sm:$0xff]
    %v274 = vld [vmem:[#allocation5 + $0x508] sm:$0xff]
    %v275 = vld [vmem:[#allocation5 + $0x510] sm:$0xff]
    %v276 = vld [vmem:[#allocation5 + $0x518] sm:$0xff]
    %v277 = vld [vmem:[#allocation5 + $0x520] sm:$0xff]
    %v278 = vld [vmem:[#allocation5 + $0x528] sm:$0xff]
    %v279 = vld [vmem:[#allocation5 + $0x530] sm:$0xff]
    %v280 = vld [vmem:[#allocation5 + $0x538] sm:$0xff]
    %v281 = vld [vmem:[#allocation5 + $0x540] sm:$0xff]
    %v282 = vld [vmem:[#allocation5 + $0x548] sm:$0xff]
    %v283 = vld [vmem:[#allocation5 + $0x550] sm:$0xff]
    %v284 = vld [vmem:[#allocation5 + $0x558] sm:$0xff]
    %v285 = vld [vmem:[#allocation5 + $0x560] sm:$0xff]
    %v286 = vld [vmem:[#allocation5 + $0x568] sm:$0xff]
    %v287 = vld [vmem:[#allocation5 + $0x570] sm:$0xff]
    %v288 = vld [vmem:[#allocation5 + $0x578] sm:$0xff]
    %v289 = vld [vmem:[#allocation5 + $0x580] sm:$0xff]
    %v290 = vld [vmem:[#allocation5 + $0x588] sm:$0xff]
    %v291 = vld [vmem:[#allocation5 + $0x590] sm:$0xff]
    %v292 = vld [vmem:[#allocation5 + $0x598] sm:$0xff]
    %v293 = vld [vmem:[#allocation5 + $0x5a0] sm:$0xff]
    %v294 = vld [vmem:[#allocation5 + $0x5a8] sm:$0xff]
    %v295 = vld [vmem:[#allocation5 + $0x5b0] sm:$0xff]
    %v296 = vld [vmem:[#allocation5 + $0x5b8] sm:$0xff]
    %v297 = vld [vmem:[#allocation5 + $0x5c0] sm:$0xff]
    %v298 = vld [vmem:[#allocation5 + $0x5c8] sm:$0xff]
    %v299 = vld [vmem:[#allocation5 + $0x5d0] sm:$0xff]
    %v300 = vld [vmem:[#allocation5 + $0x5d8] sm:$0xff]
    %v301 = vld [vmem:[#allocation5 + $0x5e0] sm:$0xff]
    %v302 = vld [vmem:[#allocation5 + $0x5e8] sm:$0xff]
    %v303 = vld [vmem:[#allocation5 + $0x5f0] sm:$0xff]
    %v304 = vld [vmem:[#allocation5 + $0x5f8] sm:$0xff]
    %v305 = vld [vmem:[#allocation5 + $0x600] sm:$0xff]
    %v306 = vld [vmem:[#allocation5 + $0x608] sm:$0xff]
    %v307 = vld [vmem:[#allocation5 + $0x610] sm:$0xff]
    %v308 = vld [vmem:[#allocation5 + $0x618] sm:$0xff]
    %v309 = vld [vmem:[#allocation5 + $0x620] sm:$0xff]
    %v310 = vld [vmem:[#allocation5 + $0x628] sm:$0xff]
    %v311 = vld [vmem:[#allocation5 + $0x630] sm:$0xff]
    %v312 = vld [vmem:[#allocation5 + $0x638] sm:$0xff]
    %v313 = vld [vmem:[#allocation5 + $0x640] sm:$0xff]
    %v314 = vld [vmem:[#allocation5 + $0x648] sm:$0xff]
    %v315 = vld [vmem:[#allocation5 + $0x650] sm:$0xff]
    %v316 = vld [vmem:[#allocation5 + $0x658] sm:$0xff]
    %v317 = vld [vmem:[#allocation5 + $0x660] sm:$0xff]
    %v318 = vld [vmem:[#allocation5 + $0x668] sm:$0xff]
    %v319 = vld [vmem:[#allocation5 + $0x670] sm:$0xff]
    %v320 = vld [vmem:[#allocation5 + $0x678] sm:$0xff]
    %v321 = vld [vmem:[#allocation5 + $0x680] sm:$0xff]
    %v322 = vld [vmem:[#allocation5 + $0x688] sm:$0xff]
    %v323 = vld [vmem:[#allocation5 + $0x690] sm:$0xff]
    %v324 = vld [vmem:[#allocation5 + $0x698] sm:$0xff]
    %v325 = vld [vmem:[#allocation5 + $0x6a0] sm:$0xff]
    %v326 = vld [vmem:[#allocation5 + $0x6a8] sm:$0xff]
    %v327 = vld [vmem:[#allocation5 + $0x6b0] sm:$0xff]
    %v328 = vld [vmem:[#allocation5 + $0x6b8] sm:$0xff]
    %v329 = vld [vmem:[#allocation5 + $0x6c0] sm:$0xff]
    %v330 = vld [vmem:[#allocation5 + $0x6c8] sm:$0xff]
    %v331 = vld [vmem:[#allocation5 + $0x6d0] sm:$0xff]
    %v332 = vld [vmem:[#allocation5 + $0x6d8] sm:$0xff]
    %v333 = vld [vmem:[#allocation5 + $0x6e0] sm:$0xff]
    %v334 = vld [vmem:[#allocation5 + $0x6e8] sm:$0xff]
    %v335 = vld [vmem:[#allocation5 + $0x6f0] sm:$0xff]
    %v336 = vld [vmem:[#allocation5 + $0x6f8] sm:$0xff]
    %v337 = vld [vmem:[#allocation5 + $0x700] sm:$0xff]
    %v338 = vld [vmem:[#allocation5 + $0x708] sm:$0xff]
    %v339 = vld [vmem:[#allocation5 + $0x710] sm:$0xff]
    %v340 = vld [vmem:[#allocation5 + $0x718] sm:$0xff]
    %v341 = vld [vmem:[#allocation5 + $0x720] sm:$0xff]
    %v342 = vld [vmem:[#allocation5 + $0x728] sm:$0xff]
    %v343 = vld [vmem:[#allocation5 + $0x730] sm:$0xff]
    %v344 = vld [vmem:[#allocation5 + $0x738] sm:$0xff]
    %v345 = vld [vmem:[#allocation5 + $0x740] sm:$0xff]
    %v346 = vld [vmem:[#allocation5 + $0x748] sm:$0xff]
    %v347 = vld [vmem:[#allocation5 + $0x750] sm:$0xff]
    %v348 = vld [vmem:[#allocation5 + $0x758] sm:$0xff]
    %v349 = vld [vmem:[#allocation5 + $0x760] sm:$0xff]
    %v350 = vld [vmem:[#allocation5 + $0x768] sm:$0xff]
    %v351 = vld [vmem:[#allocation5 + $0x770] sm:$0xff]
    %v352 = vld [vmem:[#allocation5 + $0x778] sm:$0xff]
    %v353 = vld [vmem:[#allocation5 + $0x780] sm:$0xff]
    %v354 = vld [vmem:[#allocation5 + $0x788] sm:$0xff]
    %v355 = vld [vmem:[#allocation5 + $0x790] sm:$0xff]
    %v356 = vld [vmem:[#allocation5 + $0x798] sm:$0xff]
    %v357 = vld [vmem:[#allocation5 + $0x7a0] sm:$0xff]
    %v358 = vld [vmem:[#allocation5 + $0x7a8] sm:$0xff]
    %v359 = vld [vmem:[#allocation5 + $0x7b0] sm:$0xff]
    %v360 = vld [vmem:[#allocation5 + $0x7b8] sm:$0xff]
    %v361 = vld [vmem:[#allocation5 + $0x7c0] sm:$0xff]
    %v362 = vld [vmem:[#allocation5 + $0x7c8] sm:$0xff]
    %v363 = vld [vmem:[#allocation5 + $0x7d0] sm:$0xff]
    %v364 = vld [vmem:[#allocation5 + $0x7d8] sm:$0xff]
    %v365 = vld [vmem:[#allocation5 + $0x7e0] sm:$0xff]
    %v366 = vld [vmem:[#allocation5 + $0x7e8] sm:$0xff]
    %v367 = vld [vmem:[#allocation5 + $0x7f0] sm:$0xff]
    %v368 = vld [vmem:[#allocation5 + $0x7f8] sm:$0xff]
    %v369 = vld [vmem:[#allocation5 + $0x800] sm:$0xff]
    %v370 = vld [vmem:[#allocation5 + $0x808] sm:$0xff]
    %v371 = vld [vmem:[#allocation5 + $0x810] sm:$0xff]
    %v372 = vld [vmem:[#allocation5 + $0x818] sm:$0xff]
    %v373 = vld [vmem:[#allocation5 + $0x820] sm:$0xff]
    %v374 = vld [vmem:[#allocation5 + $0x828] sm:$0xff]
    %v375 = vld [vmem:[#allocation5 + $0x830] sm:$0xff]
    %v376 = vld [vmem:[#allocation5 + $0x838] sm:$0xff]
    %v377 = vld [vmem:[#allocation5 + $0x840] sm:$0xff]
    %v378 = vld [vmem:[#allocation5 + $0x848] sm:$0xff]
    %v379 = vld [vmem:[#allocation5 + $0x850] sm:$0xff]
    %v380 = vld [vmem:[#allocation5 + $0x858] sm:$0xff]
    %v381 = vld [vmem:[#allocation5 + $0x860] sm:$0xff]
    %v382 = vld [vmem:[#allocation5 + $0x868] sm:$0xff]
    %v383 = vld [vmem:[#allocation5 + $0x870] sm:$0xff]
    %v384 = vld [vmem:[#allocation5 + $0x878] sm:$0xff]
    %v385 = vld [vmem:[#allocation5 + $0x880] sm:$0xff]
    %v386 = vld [vmem:[#allocation5 + $0x888] sm:$0xff]
    %v387 = vld [vmem:[#allocation5 + $0x890] sm:$0xff]
    %v388 = vld [vmem:[#allocation5 + $0x898] sm:$0xff]
    %v389 = vld [vmem:[#allocation5 + $0x8a0] sm:$0xff]
    %v390 = vld [vmem:[#allocation5 + $0x8a8] sm:$0xff]
    %v391 = vld [vmem:[#allocation5 + $0x8b0] sm:$0xff]
    %v392 = vld [vmem:[#allocation5 + $0x8b8] sm:$0xff]
    %v393 = vld [vmem:[#allocation5 + $0x8c0] sm:$0xff]
    %v394 = vld [vmem:[#allocation5 + $0x8c8] sm:$0xff]
    %v395 = vld [vmem:[#allocation5 + $0x8d0] sm:$0xff]
    %v396 = vld [vmem:[#allocation5 + $0x8d8] sm:$0xff]
    %v397 = vld [vmem:[#allocation5 + $0x8e0] sm:$0xff]
    %v398 = vld [vmem:[#allocation5 + $0x8e8] sm:$0xff]
    %v399 = vld [vmem:[#allocation5 + $0x8f0] sm:$0xff]
    %v400 = vld [vmem:[#allocation5 + $0x8f8] sm:$0xff]
    %v401 = vld [vmem:[#allocation5 + $0x900] sm:$0xff]
    %v402 = vld [vmem:[#allocation5 + $0x908] sm:$0xff]
    %v403 = vld [vmem:[#allocation5 + $0x910] sm:$0xff]
    %v404 = vld [vmem:[#allocation5 + $0x918] sm:$0xff]
    %v405 = vld [vmem:[#allocation5 + $0x920] sm:$0xff]
    %v406 = vld [vmem:[#allocation5 + $0x928] sm:$0xff]
    %v407 = vld [vmem:[#allocation5 + $0x930] sm:$0xff]
    %v408 = vld [vmem:[#allocation5 + $0x938] sm:$0xff]
    %v409 = vld [vmem:[#allocation5 + $0x940] sm:$0xff]
    %v410 = vld [vmem:[#allocation5 + $0x948] sm:$0xff]
    %v411 = vld [vmem:[#allocation5 + $0x950] sm:$0xff]
    %v412 = vld [vmem:[#allocation5 + $0x958] sm:$0xff]
    %v413 = vld [vmem:[#allocation5 + $0x960] sm:$0xff]
    %v414 = vld [vmem:[#allocation5 + $0x968] sm:$0xff]
    %v415 = vld [vmem:[#allocation5 + $0x970] sm:$0xff]
    %v416 = vld [vmem:[#allocation5 + $0x978] sm:$0xff]
    %v417 = vld [vmem:[#allocation5 + $0x980] sm:$0xff]
    %v418 = vld [vmem:[#allocation5 + $0x988] sm:$0xff]
    %v419 = vld [vmem:[#allocation5 + $0x990] sm:$0xff]
    %v420 = vld [vmem:[#allocation5 + $0x998] sm:$0xff]
    %v421 = vld [vmem:[#allocation5 + $0x9a0] sm:$0xff]
    %v422 = vld [vmem:[#allocation5 + $0x9a8] sm:$0xff]
    %v423 = vld [vmem:[#allocation5 + $0x9b0] sm:$0xff]
    %v424 = vld [vmem:[#allocation5 + $0x9b8] sm:$0xff]
    %v425 = vld [vmem:[#allocation5 + $0x9c0] sm:$0xff]
    %v426 = vld [vmem:[#allocation5 + $0x9c8] sm:$0xff]
    %v427 = vld [vmem:[#allocation5 + $0x9d0] sm:$0xff]
    %v428 = vld [vmem:[#allocation5 + $0x9d8] sm:$0xff]
    %v429 = vld [vmem:[#allocation5 + $0x9e0] sm:$0xff]
    %v430 = vld [vmem:[#allocation5 + $0x9e8] sm:$0xff]
    %v431 = vld [vmem:[#allocation5 + $0x9f0] sm:$0xff]
    %v432 = vld [vmem:[#allocation5 + $0x9f8] sm:$0xff]
    %v753 = vunpack.c.l.b16 %v113
    %v754 = vunpack.c.h.b16 %v113
    %v755 = vunpack.c.l.b16 %v114
    %v756 = vunpack.c.h.b16 %v114
    %v757 = vunpack.c.l.b16 %v115
    %v758 = vunpack.c.h.b16 %v115
    %v759 = vunpack.c.l.b16 %v116
    %v760 = vunpack.c.h.b16 %v116
    %v761 = vunpack.c.l.b16 %v117
    %v762 = vunpack.c.h.b16 %v117
    %v763 = vunpack.c.l.b16 %v118
    %v764 = vunpack.c.h.b16 %v118
    %v765 = vunpack.c.l.b16 %v119
    %v766 = vunpack.c.h.b16 %v119
    %v767 = vunpack.c.l.b16 %v120
    %v768 = vunpack.c.h.b16 %v120
    %v769 = vunpack.c.l.b16 %v121
    %v770 = vunpack.c.h.b16 %v121
    %v771 = vunpack.c.l.b16 %v122
    %v772 = vunpack.c.h.b16 %v122
    %v773 = vunpack.c.l.b16 %v123
    %v774 = vunpack.c.h.b16 %v123
    %v775 = vunpack.c.l.b16 %v124
    %v776 = vunpack.c.h.b16 %v124
    %v777 = vunpack.c.l.b16 %v125
    %v778 = vunpack.c.h.b16 %v125
    %v779 = vunpack.c.l.b16 %v126
    %v780 = vunpack.c.h.b16 %v126
    %v781 = vunpack.c.l.b16 %v127
    %v782 = vunpack.c.h.b16 %v127
    %v783 = vunpack.c.l.b16 %v128
    %v784 = vunpack.c.h.b16 %v128
    %v785 = vunpack.c.l.b16 %v129
    %v786 = vunpack.c.h.b16 %v129
    %v787 = vunpack.c.l.b16 %v130
    %v788 = vunpack.c.h.b16 %v130
    %v789 = vunpack.c.l.b16 %v131
    %v790 = vunpack.c.h.b16 %v131
    %v791 = vunpack.c.l.b16 %v132
    %v792 = vunpack.c.h.b16 %v132
    %v793 = vunpack.c.l.b16 %v133
    %v794 = vunpack.c.h.b16 %v133
    %v795 = vunpack.c.l.b16 %v134
    %v796 = vunpack.c.h.b16 %v134
    %v797 = vunpack.c.l.b16 %v135
    %v798 = vunpack.c.h.b16 %v135
    %v799 = vunpack.c.l.b16 %v136
    %v800 = vunpack.c.h.b16 %v136
    %v801 = vunpack.c.l.b16 %v137
    %v802 = vunpack.c.h.b16 %v137
    %v803 = vunpack.c.l.b16 %v138
    %v804 = vunpack.c.h.b16 %v138
    %v805 = vunpack.c.l.b16 %v139
    %v806 = vunpack.c.h.b16 %v139
    %v807 = vunpack.c.l.b16 %v140
    %v808 = vunpack.c.h.b16 %v140
    %v809 = vunpack.c.l.b16 %v141
    %v810 = vunpack.c.h.b16 %v141
    %v811 = vunpack.c.l.b16 %v142
    %v812 = vunpack.c.h.b16 %v142
    %v813 = vunpack.c.l.b16 %v143
    %v814 = vunpack.c.h.b16 %v143
    %v815 = vunpack.c.l.b16 %v144
    %v816 = vunpack.c.h.b16 %v144
    %v817 = vunpack.c.l.b16 %v145
    %v818 = vunpack.c.h.b16 %v145
    %v819 = vunpack.c.l.b16 %v146
    %v820 = vunpack.c.h.b16 %v146
    %v821 = vunpack.c.l.b16 %v147
    %v822 = vunpack.c.h.b16 %v147
    %v823 = vunpack.c.l.b16 %v148
    %v824 = vunpack.c.h.b16 %v148
    %v825 = vunpack.c.l.b16 %v149
    %v826 = vunpack.c.h.b16 %v149
    %v827 = vunpack.c.l.b16 %v150
    %v828 = vunpack.c.h.b16 %v150
    %v829 = vunpack.c.l.b16 %v151
    %v830 = vunpack.c.h.b16 %v151
    %v831 = vunpack.c.l.b16 %v152
    %v832 = vunpack.c.h.b16 %v152
    %v833 = vunpack.c.l.b16 %v153
    %v834 = vunpack.c.h.b16 %v153
    %v835 = vunpack.c.l.b16 %v154
    %v836 = vunpack.c.h.b16 %v154
    %v837 = vunpack.c.l.b16 %v155
    %v838 = vunpack.c.h.b16 %v155
    %v839 = vunpack.c.l.b16 %v156
    %v840 = vunpack.c.h.b16 %v156
    %v841 = vunpack.c.l.b16 %v157
    %v842 = vunpack.c.h.b16 %v157
    %v843 = vunpack.c.l.b16 %v158
    %v844 = vunpack.c.h.b16 %v158
    %v845 = vunpack.c.l.b16 %v159
    %v846 = vunpack.c.h.b16 %v159
    %v847 = vunpack.c.l.b16 %v160
    %v848 = vunpack.c.h.b16 %v160
    %v849 = vunpack.c.l.b16 %v161
    %v850 = vunpack.c.h.b16 %v161
    %v851 = vunpack.c.l.b16 %v162
    %v852 = vunpack.c.h.b16 %v162
    %v853 = vunpack.c.l.b16 %v163
    %v854 = vunpack.c.h.b16 %v163
    %v855 = vunpack.c.l.b16 %v164
    %v856 = vunpack.c.h.b16 %v164
    %v857 = vunpack.c.l.b16 %v165
    %v858 = vunpack.c.h.b16 %v165
    %v859 = vunpack.c.l.b16 %v166
    %v860 = vunpack.c.h.b16 %v166
    %v861 = vunpack.c.l.b16 %v167
    %v862 = vunpack.c.h.b16 %v167
    %v863 = vunpack.c.l.b16 %v168
    %v864 = vunpack.c.h.b16 %v168
    %v865 = vunpack.c.l.b16 %v169
    %v866 = vunpack.c.h.b16 %v169
    %v867 = vunpack.c.l.b16 %v170
    %v868 = vunpack.c.h.b16 %v170
    %v869 = vunpack.c.l.b16 %v171
    %v870 = vunpack.c.h.b16 %v171
    %v871 = vunpack.c.l.b16 %v172
    %v872 = vunpack.c.h.b16 %v172
    %v873 = vunpack.c.l.b16 %v173
    %v874 = vunpack.c.h.b16 %v173
    %v875 = vunpack.c.l.b16 %v174
    %v876 = vunpack.c.h.b16 %v174
    %v877 = vunpack.c.l.b16 %v175
    %v878 = vunpack.c.h.b16 %v175
    %v879 = vunpack.c.l.b16 %v176
    %v880 = vunpack.c.h.b16 %v176
    %v881 = vunpack.c.l.b16 %v177
    %v882 = vunpack.c.h.b16 %v177
    %v883 = vunpack.c.l.b16 %v178
    %v884 = vunpack.c.h.b16 %v178
    %v885 = vunpack.c.l.b16 %v179
    %v886 = vunpack.c.h.b16 %v179
    %v887 = vunpack.c.l.b16 %v180
    %v888 = vunpack.c.h.b16 %v180
    %v889 = vunpack.c.l.b16 %v181
    %v890 = vunpack.c.h.b16 %v181
    %v891 = vunpack.c.l.b16 %v182
    %v892 = vunpack.c.h.b16 %v182
    %v893 = vunpack.c.l.b16 %v183
    %v894 = vunpack.c.h.b16 %v183
    %v895 = vunpack.c.l.b16 %v184
    %v896 = vunpack.c.h.b16 %v184
    %v897 = vunpack.c.l.b16 %v185
    %v898 = vunpack.c.h.b16 %v185
    %v899 = vunpack.c.l.b16 %v186
    %v900 = vunpack.c.h.b16 %v186
    %v901 = vunpack.c.l.b16 %v187
    %v902 = vunpack.c.h.b16 %v187
    %v903 = vunpack.c.l.b16 %v188
    %v904 = vunpack.c.h.b16 %v188
    %v905 = vunpack.c.l.b16 %v189
    %v906 = vunpack.c.h.b16 %v189
    %v907 = vunpack.c.l.b16 %v190
    %v908 = vunpack.c.h.b16 %v190
    %v909 = vunpack.c.l.b16 %v191
    %v910 = vunpack.c.h.b16 %v191
    %v911 = vunpack.c.l.b16 %v192
    %v912 = vunpack.c.h.b16 %v192
    %v913 = vunpack.c.l.b16 %v193
    %v914 = vunpack.c.h.b16 %v193
    %v915 = vunpack.c.l.b16 %v194
    %v916 = vunpack.c.h.b16 %v194
    %v917 = vunpack.c.l.b16 %v195
    %v918 = vunpack.c.h.b16 %v195
    %v919 = vunpack.c.l.b16 %v196
    %v920 = vunpack.c.h.b16 %v196
    %v921 = vunpack.c.l.b16 %v197
    %v922 = vunpack.c.h.b16 %v197
    %v923 = vunpack.c.l.b16 %v198
    %v924 = vunpack.c.h.b16 %v198
    %v925 = vunpack.c.l.b16 %v199
    %v926 = vunpack.c.h.b16 %v199
    %v927 = vunpack.c.l.b16 %v200
    %v928 = vunpack.c.h.b16 %v200
    %v929 = vunpack.c.l.b16 %v201
    %v930 = vunpack.c.h.b16 %v201
    %v931 = vunpack.c.l.b16 %v202
    %v932 = vunpack.c.h.b16 %v202
    %v933 = vunpack.c.l.b16 %v203
    %v934 = vunpack.c.h.b16 %v203
    %v935 = vunpack.c.l.b16 %v204
    %v936 = vunpack.c.h.b16 %v204
    %v937 = vunpack.c.l.b16 %v205
    %v938 = vunpack.c.h.b16 %v205
    %v939 = vunpack.c.l.b16 %v206
    %v940 = vunpack.c.h.b16 %v206
    %v941 = vunpack.c.l.b16 %v207
    %v942 = vunpack.c.h.b16 %v207
    %v943 = vunpack.c.l.b16 %v208
    %v944 = vunpack.c.h.b16 %v208
    %v945 = vunpack.c.l.b16 %v209
    %v946 = vunpack.c.h.b16 %v209
    %v947 = vunpack.c.l.b16 %v210
    %v948 = vunpack.c.h.b16 %v210
    %v949 = vunpack.c.l.b16 %v211
    %v950 = vunpack.c.h.b16 %v211
    %v951 = vunpack.c.l.b16 %v212
    %v952 = vunpack.c.h.b16 %v212
    %v953 = vunpack.c.l.b16 %v213
    %v954 = vunpack.c.h.b16 %v213
    %v955 = vunpack.c.l.b16 %v214
    %v956 = vunpack.c.h.b16 %v214
    %v957 = vunpack.c.l.b16 %v215
    %v958 = vunpack.c.h.b16 %v215
    %v959 = vunpack.c.l.b16 %v216
    %v960 = vunpack.c.h.b16 %v216
    %v961 = vunpack.c.l.b16 %v217
    %v962 = vunpack.c.h.b16 %v217
    %v963 = vunpack.c.l.b16 %v218
    %v964 = vunpack.c.h.b16 %v218
    %v965 = vunpack.c.l.b16 %v219
    %v966 = vunpack.c.h.b16 %v219
    %v967 = vunpack.c.l.b16 %v220
    %v968 = vunpack.c.h.b16 %v220
    %v969 = vunpack.c.l.b16 %v221
    %v970 = vunpack.c.h.b16 %v221
    %v971 = vunpack.c.l.b16 %v222
    %v972 = vunpack.c.h.b16 %v222
    %v973 = vunpack.c.l.b16 %v223
    %v974 = vunpack.c.h.b16 %v223
    %v975 = vunpack.c.l.b16 %v224
    %v976 = vunpack.c.h.b16 %v224
    %v977 = vunpack.c.l.b16 %v225
    %v978 = vunpack.c.h.b16 %v225
    %v979 = vunpack.c.l.b16 %v226
    %v980 = vunpack.c.h.b16 %v226
    %v981 = vunpack.c.l.b16 %v227
    %v982 = vunpack.c.h.b16 %v227
    %v983 = vunpack.c.l.b16 %v228
    %v984 = vunpack.c.h.b16 %v228
    %v985 = vunpack.c.l.b16 %v229
    %v986 = vunpack.c.h.b16 %v229
    %v987 = vunpack.c.l.b16 %v230
    %v988 = vunpack.c.h.b16 %v230
    %v989 = vunpack.c.l.b16 %v231
    %v990 = vunpack.c.h.b16 %v231
    %v991 = vunpack.c.l.b16 %v232
    %v992 = vunpack.c.h.b16 %v232
    %v993 = vunpack.c.l.b16 %v233
    %v994 = vunpack.c.h.b16 %v233
    %v995 = vunpack.c.l.b16 %v234
    %v996 = vunpack.c.h.b16 %v234
    %v997 = vunpack.c.l.b16 %v235
    %v998 = vunpack.c.h.b16 %v235
    %v999 = vunpack.c.l.b16 %v236
    %v1000 = vunpack.c.h.b16 %v236
    %v1001 = vunpack.c.l.b16 %v237
    %v1002 = vunpack.c.h.b16 %v237
    %v1003 = vunpack.c.l.b16 %v238
    %v1004 = vunpack.c.h.b16 %v238
    %v1005 = vunpack.c.l.b16 %v239
    %v1006 = vunpack.c.h.b16 %v239
    %v1007 = vunpack.c.l.b16 %v240
    %v1008 = vunpack.c.h.b16 %v240
    %v1009 = vunpack.c.l.b16 %v241
    %v1010 = vunpack.c.h.b16 %v241
    %v1011 = vunpack.c.l.b16 %v242
    %v1012 = vunpack.c.h.b16 %v242
    %v1013 = vunpack.c.l.b16 %v243
    %v1014 = vunpack.c.h.b16 %v243
    %v1015 = vunpack.c.l.b16 %v244
    %v1016 = vunpack.c.h.b16 %v244
    %v1017 = vunpack.c.l.b16 %v245
    %v1018 = vunpack.c.h.b16 %v245
    %v1019 = vunpack.c.l.b16 %v246
    %v1020 = vunpack.c.h.b16 %v246
    %v1021 = vunpack.c.l.b16 %v247
    %v1022 = vunpack.c.h.b16 %v247
    %v1023 = vunpack.c.l.b16 %v248
    %v1024 = vunpack.c.h.b16 %v248
    %v1025 = vunpack.c.l.b16 %v249
    %v1026 = vunpack.c.h.b16 %v249
    %v1027 = vunpack.c.l.b16 %v250
    %v1028 = vunpack.c.h.b16 %v250
    %v1029 = vunpack.c.l.b16 %v251
    %v1030 = vunpack.c.h.b16 %v251
    %v1031 = vunpack.c.l.b16 %v252
    %v1032 = vunpack.c.h.b16 %v252
    %v1033 = vunpack.c.l.b16 %v253
    %v1034 = vunpack.c.h.b16 %v253
    %v1035 = vunpack.c.l.b16 %v254
    %v1036 = vunpack.c.h.b16 %v254
    %v1037 = vunpack.c.l.b16 %v255
    %v1038 = vunpack.c.h.b16 %v255
    %v1039 = vunpack.c.l.b16 %v256
    %v1040 = vunpack.c.h.b16 %v256
    %v1041 = vunpack.c.l.b16 %v257
    %v1042 = vunpack.c.h.b16 %v257
    %v1043 = vunpack.c.l.b16 %v258
    %v1044 = vunpack.c.h.b16 %v258
    %v1045 = vunpack.c.l.b16 %v259
    %v1046 = vunpack.c.h.b16 %v259
    %v1047 = vunpack.c.l.b16 %v260
    %v1048 = vunpack.c.h.b16 %v260
    %v1049 = vunpack.c.l.b16 %v261
    %v1050 = vunpack.c.h.b16 %v261
    %v1051 = vunpack.c.l.b16 %v262
    %v1052 = vunpack.c.h.b16 %v262
    %v1053 = vunpack.c.l.b16 %v263
    %v1054 = vunpack.c.h.b16 %v263
    %v1055 = vunpack.c.l.b16 %v264
    %v1056 = vunpack.c.h.b16 %v264
    %v1057 = vunpack.c.l.b16 %v265
    %v1058 = vunpack.c.h.b16 %v265
    %v1059 = vunpack.c.l.b16 %v266
    %v1060 = vunpack.c.h.b16 %v266
    %v1061 = vunpack.c.l.b16 %v267
    %v1062 = vunpack.c.h.b16 %v267
    %v1063 = vunpack.c.l.b16 %v268
    %v1064 = vunpack.c.h.b16 %v268
    %v1065 = vunpack.c.l.b16 %v269
    %v1066 = vunpack.c.h.b16 %v269
    %v1067 = vunpack.c.l.b16 %v270
    %v1068 = vunpack.c.h.b16 %v270
    %v1069 = vunpack.c.l.b16 %v271
    %v1070 = vunpack.c.h.b16 %v271
    %v1071 = vunpack.c.l.b16 %v272
    %v1072 = vunpack.c.h.b16 %v272
    %v1073 = vunpack.c.l.b16 %v273
    %v1074 = vunpack.c.h.b16 %v273
    %v1075 = vunpack.c.l.b16 %v274
    %v1076 = vunpack.c.h.b16 %v274
    %v1077 = vunpack.c.l.b16 %v275
    %v1078 = vunpack.c.h.b16 %v275
    %v1079 = vunpack.c.l.b16 %v276
    %v1080 = vunpack.c.h.b16 %v276
    %v1081 = vunpack.c.l.b16 %v277
    %v1082 = vunpack.c.h.b16 %v277
    %v1083 = vunpack.c.l.b16 %v278
    %v1084 = vunpack.c.h.b16 %v278
    %v1085 = vunpack.c.l.b16 %v279
    %v1086 = vunpack.c.h.b16 %v279
    %v1087 = vunpack.c.l.b16 %v280
    %v1088 = vunpack.c.h.b16 %v280
    %v1089 = vunpack.c.l.b16 %v281
    %v1090 = vunpack.c.h.b16 %v281
    %v1091 = vunpack.c.l.b16 %v282
    %v1092 = vunpack.c.h.b16 %v282
    %v1093 = vunpack.c.l.b16 %v283
    %v1094 = vunpack.c.h.b16 %v283
    %v1095 = vunpack.c.l.b16 %v284
    %v1096 = vunpack.c.h.b16 %v284
    %v1097 = vunpack.c.l.b16 %v285
    %v1098 = vunpack.c.h.b16 %v285
    %v1099 = vunpack.c.l.b16 %v286
    %v1100 = vunpack.c.h.b16 %v286
    %v1101 = vunpack.c.l.b16 %v287
    %v1102 = vunpack.c.h.b16 %v287
    %v1103 = vunpack.c.l.b16 %v288
    %v1104 = vunpack.c.h.b16 %v288
    %v1105 = vunpack.c.l.b16 %v289
    %v1106 = vunpack.c.h.b16 %v289
    %v1107 = vunpack.c.l.b16 %v290
    %v1108 = vunpack.c.h.b16 %v290
    %v1109 = vunpack.c.l.b16 %v291
    %v1110 = vunpack.c.h.b16 %v291
    %v1111 = vunpack.c.l.b16 %v292
    %v1112 = vunpack.c.h.b16 %v292
    %v1113 = vunpack.c.l.b16 %v293
    %v1114 = vunpack.c.h.b16 %v293
    %v1115 = vunpack.c.l.b16 %v294
    %v1116 = vunpack.c.h.b16 %v294
    %v1117 = vunpack.c.l.b16 %v295
    %v1118 = vunpack.c.h.b16 %v295
    %v1119 = vunpack.c.l.b16 %v296
    %v1120 = vunpack.c.h.b16 %v296
    %v1121 = vunpack.c.l.b16 %v297
    %v1122 = vunpack.c.h.b16 %v297
    %v1123 = vunpack.c.l.b16 %v298
    %v1124 = vunpack.c.h.b16 %v298
    %v1125 = vunpack.c.l.b16 %v299
    %v1126 = vunpack.c.h.b16 %v299
    %v1127 = vunpack.c.l.b16 %v300
    %v1128 = vunpack.c.h.b16 %v300
    %v1129 = vunpack.c.l.b16 %v301
    %v1130 = vunpack.c.h.b16 %v301
    %v1131 = vunpack.c.l.b16 %v302
    %v1132 = vunpack.c.h.b16 %v302
    %v1133 = vunpack.c.l.b16 %v303
    %v1134 = vunpack.c.h.b16 %v303
    %v1135 = vunpack.c.l.b16 %v304
    %v1136 = vunpack.c.h.b16 %v304
    %v1137 = vunpack.c.l.b16 %v305
    %v1138 = vunpack.c.h.b16 %v305
    %v1139 = vunpack.c.l.b16 %v306
    %v1140 = vunpack.c.h.b16 %v306
    %v1141 = vunpack.c.l.b16 %v307
    %v1142 = vunpack.c.h.b16 %v307
    %v1143 = vunpack.c.l.b16 %v308
    %v1144 = vunpack.c.h.b16 %v308
    %v1145 = vunpack.c.l.b16 %v309
    %v1146 = vunpack.c.h.b16 %v309
    %v1147 = vunpack.c.l.b16 %v310
    %v1148 = vunpack.c.h.b16 %v310
    %v1149 = vunpack.c.l.b16 %v311
    %v1150 = vunpack.c.h.b16 %v311
    %v1151 = vunpack.c.l.b16 %v312
    %v1152 = vunpack.c.h.b16 %v312
    %v1153 = vunpack.c.l.b16 %v313
    %v1154 = vunpack.c.h.b16 %v313
    %v1155 = vunpack.c.l.b16 %v314
    %v1156 = vunpack.c.h.b16 %v314
    %v1157 = vunpack.c.l.b16 %v315
    %v1158 = vunpack.c.h.b16 %v315
    %v1159 = vunpack.c.l.b16 %v316
    %v1160 = vunpack.c.h.b16 %v316
    %v1161 = vunpack.c.l.b16 %v317
    %v1162 = vunpack.c.h.b16 %v317
    %v1163 = vunpack.c.l.b16 %v318
    %v1164 = vunpack.c.h.b16 %v318
    %v1165 = vunpack.c.l.b16 %v319
    %v1166 = vunpack.c.h.b16 %v319
    %v1167 = vunpack.c.l.b16 %v320
    %v1168 = vunpack.c.h.b16 %v320
    %v1169 = vunpack.c.l.b16 %v321
    %v1170 = vunpack.c.h.b16 %v321
    %v1171 = vunpack.c.l.b16 %v322
    %v1172 = vunpack.c.h.b16 %v322
    %v1173 = vunpack.c.l.b16 %v323
    %v1174 = vunpack.c.h.b16 %v323
    %v1175 = vunpack.c.l.b16 %v324
    %v1176 = vunpack.c.h.b16 %v324
    %v1177 = vunpack.c.l.b16 %v325
    %v1178 = vunpack.c.h.b16 %v325
    %v1179 = vunpack.c.l.b16 %v326
    %v1180 = vunpack.c.h.b16 %v326
    %v1181 = vunpack.c.l.b16 %v327
    %v1182 = vunpack.c.h.b16 %v327
    %v1183 = vunpack.c.l.b16 %v328
    %v1184 = vunpack.c.h.b16 %v328
    %v1185 = vunpack.c.l.b16 %v329
    %v1186 = vunpack.c.h.b16 %v329
    %v1187 = vunpack.c.l.b16 %v330
    %v1188 = vunpack.c.h.b16 %v330
    %v1189 = vunpack.c.l.b16 %v331
    %v1190 = vunpack.c.h.b16 %v331
    %v1191 = vunpack.c.l.b16 %v332
    %v1192 = vunpack.c.h.b16 %v332
    %v1193 = vunpack.c.l.b16 %v333
    %v1194 = vunpack.c.h.b16 %v333
    %v1195 = vunpack.c.l.b16 %v334
    %v1196 = vunpack.c.h.b16 %v334
    %v1197 = vunpack.c.l.b16 %v335
    %v1198 = vunpack.c.h.b16 %v335
    %v1199 = vunpack.c.l.b16 %v336
    %v1200 = vunpack.c.h.b16 %v336
    %v1201 = vunpack.c.l.b16 %v337
    %v1202 = vunpack.c.h.b16 %v337
    %v1203 = vunpack.c.l.b16 %v338
    %v1204 = vunpack.c.h.b16 %v338
    %v1205 = vunpack.c.l.b16 %v339
    %v1206 = vunpack.c.h.b16 %v339
    %v1207 = vunpack.c.l.b16 %v340
    %v1208 = vunpack.c.h.b16 %v340
    %v1209 = vunpack.c.l.b16 %v341
    %v1210 = vunpack.c.h.b16 %v341
    %v1211 = vunpack.c.l.b16 %v342
    %v1212 = vunpack.c.h.b16 %v342
    %v1213 = vunpack.c.l.b16 %v343
    %v1214 = vunpack.c.h.b16 %v343
    %v1215 = vunpack.c.l.b16 %v344
    %v1216 = vunpack.c.h.b16 %v344
    %v1217 = vunpack.c.l.b16 %v345
    %v1218 = vunpack.c.h.b16 %v345
    %v1219 = vunpack.c.l.b16 %v346
    %v1220 = vunpack.c.h.b16 %v346
    %v1221 = vunpack.c.l.b16 %v347
    %v1222 = vunpack.c.h.b16 %v347
    %v1223 = vunpack.c.l.b16 %v348
    %v1224 = vunpack.c.h.b16 %v348
    %v1225 = vunpack.c.l.b16 %v349
    %v1226 = vunpack.c.h.b16 %v349
    %v1227 = vunpack.c.l.b16 %v350
    %v1228 = vunpack.c.h.b16 %v350
    %v1229 = vunpack.c.l.b16 %v351
    %v1230 = vunpack.c.h.b16 %v351
    %v1231 = vunpack.c.l.b16 %v352
    %v1232 = vunpack.c.h.b16 %v352
    %v1233 = vunpack.c.l.b16 %v353
    %v1234 = vunpack.c.h.b16 %v353
    %v1235 = vunpack.c.l.b16 %v354
    %v1236 = vunpack.c.h.b16 %v354
    %v1237 = vunpack.c.l.b16 %v355
    %v1238 = vunpack.c.h.b16 %v355
    %v1239 = vunpack.c.l.b16 %v356
    %v1240 = vunpack.c.h.b16 %v356
    %v1241 = vunpack.c.l.b16 %v357
    %v1242 = vunpack.c.h.b16 %v357
    %v1243 = vunpack.c.l.b16 %v358
    %v1244 = vunpack.c.h.b16 %v358
    %v1245 = vunpack.c.l.b16 %v359
    %v1246 = vunpack.c.h.b16 %v359
    %v1247 = vunpack.c.l.b16 %v360
    %v1248 = vunpack.c.h.b16 %v360
    %v1249 = vunpack.c.l.b16 %v361
    %v1250 = vunpack.c.h.b16 %v361
    %v1251 = vunpack.c.l.b16 %v362
    %v1252 = vunpack.c.h.b16 %v362
    %v1253 = vunpack.c.l.b16 %v363
    %v1254 = vunpack.c.h.b16 %v363
    %v1255 = vunpack.c.l.b16 %v364
    %v1256 = vunpack.c.h.b16 %v364
    %v1257 = vunpack.c.l.b16 %v365
    %v1258 = vunpack.c.h.b16 %v365
    %v1259 = vunpack.c.l.b16 %v366
    %v1260 = vunpack.c.h.b16 %v366
    %v1261 = vunpack.c.l.b16 %v367
    %v1262 = vunpack.c.h.b16 %v367
    %v1263 = vunpack.c.l.b16 %v368
    %v1264 = vunpack.c.h.b16 %v368
    %v1265 = vunpack.c.l.b16 %v369
    %v1266 = vunpack.c.h.b16 %v369
    %v1267 = vunpack.c.l.b16 %v370
    %v1268 = vunpack.c.h.b16 %v370
    %v1269 = vunpack.c.l.b16 %v371
    %v1270 = vunpack.c.h.b16 %v371
    %v1271 = vunpack.c.l.b16 %v372
    %v1272 = vunpack.c.h.b16 %v372
    %v1273 = vunpack.c.l.b16 %v373
    %v1274 = vunpack.c.h.b16 %v373
    %v1275 = vunpack.c.l.b16 %v374
    %v1276 = vunpack.c.h.b16 %v374
    %v1277 = vunpack.c.l.b16 %v375
    %v1278 = vunpack.c.h.b16 %v375
    %v1279 = vunpack.c.l.b16 %v376
    %v1280 = vunpack.c.h.b16 %v376
    %v1281 = vunpack.c.l.b16 %v377
    %v1282 = vunpack.c.h.b16 %v377
    %v1283 = vunpack.c.l.b16 %v378
    %v1284 = vunpack.c.h.b16 %v378
    %v1285 = vunpack.c.l.b16 %v379
    %v1286 = vunpack.c.h.b16 %v379
    %v1287 = vunpack.c.l.b16 %v380
    %v1288 = vunpack.c.h.b16 %v380
    %v1289 = vunpack.c.l.b16 %v381
    %v1290 = vunpack.c.h.b16 %v381
    %v1291 = vunpack.c.l.b16 %v382
    %v1292 = vunpack.c.h.b16 %v382
    %v1293 = vunpack.c.l.b16 %v383
    %v1294 = vunpack.c.h.b16 %v383
    %v1295 = vunpack.c.l.b16 %v384
    %v1296 = vunpack.c.h.b16 %v384
    %v1297 = vunpack.c.l.b16 %v385
    %v1298 = vunpack.c.h.b16 %v385
    %v1299 = vunpack.c.l.b16 %v386
    %v1300 = vunpack.c.h.b16 %v386
    %v1301 = vunpack.c.l.b16 %v387
    %v1302 = vunpack.c.h.b16 %v387
    %v1303 = vunpack.c.l.b16 %v388
    %v1304 = vunpack.c.h.b16 %v388
    %v1305 = vunpack.c.l.b16 %v389
    %v1306 = vunpack.c.h.b16 %v389
    %v1307 = vunpack.c.l.b16 %v390
    %v1308 = vunpack.c.h.b16 %v390
    %v1309 = vunpack.c.l.b16 %v391
    %v1310 = vunpack.c.h.b16 %v391
    %v1311 = vunpack.c.l.b16 %v392
    %v1312 = vunpack.c.h.b16 %v392
    %v1313 = vunpack.c.l.b16 %v393
    %v1314 = vunpack.c.h.b16 %v393
    %v1315 = vunpack.c.l.b16 %v394
    %v1316 = vunpack.c.h.b16 %v394
    %v1317 = vunpack.c.l.b16 %v395
    %v1318 = vunpack.c.h.b16 %v395
    %v1319 = vunpack.c.l.b16 %v396
    %v1320 = vunpack.c.h.b16 %v396
    %v1321 = vunpack.c.l.b16 %v397
    %v1322 = vunpack.c.h.b16 %v397
    %v1323 = vunpack.c.l.b16 %v398
    %v1324 = vunpack.c.h.b16 %v398
    %v1325 = vunpack.c.l.b16 %v399
    %v1326 = vunpack.c.h.b16 %v399
    %v1327 = vunpack.c.l.b16 %v400
    %v1328 = vunpack.c.h.b16 %v400
    %v1329 = vunpack.c.l.b16 %v401
    %v1330 = vunpack.c.h.b16 %v401
    %v1331 = vunpack.c.l.b16 %v402
    %v1332 = vunpack.c.h.b16 %v402
    %v1333 = vunpack.c.l.b16 %v403
    %v1334 = vunpack.c.h.b16 %v403
    %v1335 = vunpack.c.l.b16 %v404
    %v1336 = vunpack.c.h.b16 %v404
    %v1337 = vunpack.c.l.b16 %v405
    %v1338 = vunpack.c.h.b16 %v405
    %v1339 = vunpack.c.l.b16 %v406
    %v1340 = vunpack.c.h.b16 %v406
    %v1341 = vunpack.c.l.b16 %v407
    %v1342 = vunpack.c.h.b16 %v407
    %v1343 = vunpack.c.l.b16 %v408
    %v1344 = vunpack.c.h.b16 %v408
    %v1345 = vunpack.c.l.b16 %v409
    %v1346 = vunpack.c.h.b16 %v409
    %v1347 = vunpack.c.l.b16 %v410
    %v1348 = vunpack.c.h.b16 %v410
    %v1349 = vunpack.c.l.b16 %v411
    %v1350 = vunpack.c.h.b16 %v411
    %v1351 = vunpack.c.l.b16 %v412
    %v1352 = vunpack.c.h.b16 %v412
    %v1353 = vunpack.c.l.b16 %v413
    %v1354 = vunpack.c.h.b16 %v413
    %v1355 = vunpack.c.l.b16 %v414
    %v1356 = vunpack.c.h.b16 %v414
    %v1357 = vunpack.c.l.b16 %v415
    %v1358 = vunpack.c.h.b16 %v415
    %v1359 = vunpack.c.l.b16 %v416
    %v1360 = vunpack.c.h.b16 %v416
    %v1361 = vunpack.c.l.b16 %v417
    %v1362 = vunpack.c.h.b16 %v417
    %v1363 = vunpack.c.l.b16 %v418
    %v1364 = vunpack.c.h.b16 %v418
    %v1365 = vunpack.c.l.b16 %v419
    %v1366 = vunpack.c.h.b16 %v419
    %v1367 = vunpack.c.l.b16 %v420
    %v1368 = vunpack.c.h.b16 %v420
    %v1369 = vunpack.c.l.b16 %v421
    %v1370 = vunpack.c.h.b16 %v421
    %v1371 = vunpack.c.l.b16 %v422
    %v1372 = vunpack.c.h.b16 %v422
    %v1373 = vunpack.c.l.b16 %v423
    %v1374 = vunpack.c.h.b16 %v423
    %v1375 = vunpack.c.l.b16 %v424
    %v1376 = vunpack.c.h.b16 %v424
    %v1377 = vunpack.c.l.b16 %v425
    %v1378 = vunpack.c.h.b16 %v425
    %v1379 = vunpack.c.l.b16 %v426
    %v1380 = vunpack.c.h.b16 %v426
    %v1381 = vunpack.c.l.b16 %v427
    %v1382 = vunpack.c.h.b16 %v427
    %v1383 = vunpack.c.l.b16 %v428
    %v1384 = vunpack.c.h.b16 %v428
    %v1385 = vunpack.c.l.b16 %v429
    %v1386 = vunpack.c.h.b16 %v429
    %v1387 = vunpack.c.l.b16 %v430
    %v1388 = vunpack.c.h.b16 %v430
    %v1389 = vunpack.c.l.b16 %v431
    %v1390 = vunpack.c.h.b16 %v431
    %v1391 = vunpack.c.l.b16 %v432
    %v1392 = vunpack.c.h.b16 %v432
    %v1393 = vpack.c.b16 %v763, %v753
    %v1394 = vpack.c.b16 %v764, %v754
    %v1395 = vpack.c.b16 %v765, %v755
    %v1396 = vpack.c.b16 %v766, %v756
    %v1397 = vpack.c.b16 %v767, %v757
    %v1398 = vpack.c.b16 %v768, %v758
    %v1399 = vpack.c.b16 %v769, %v759
    %v1400 = vpack.c.b16 %v770, %v760
    %v1401 = vpack.c.b16 %v771, %v761
    %v1402 = vpack.c.b16 %v772, %v762
    %v1403 = vpack.c.b16 %v783, %v773
    %v1404 = vpack.c.b16 %v784, %v774
    %v1405 = vpack.c.b16 %v785, %v775
    %v1406 = vpack.c.b16 %v786, %v776
    %v1407 = vpack.c.b16 %v787, %v777
    %v1408 = vpack.c.b16 %v788, %v778
    %v1409 = vpack.c.b16 %v789, %v779
    %v1410 = vpack.c.b16 %v790, %v780
    %v1411 = vpack.c.b16 %v791, %v781
    %v1412 = vpack.c.b16 %v792, %v782
    %v1413 = vpack.c.b16 %v803, %v793
    %v1414 = vpack.c.b16 %v804, %v794
    %v1415 = vpack.c.b16 %v805, %v795
    %v1416 = vpack.c.b16 %v806, %v796
    %v1417 = vpack.c.b16 %v807, %v797
    %v1418 = vpack.c.b16 %v808, %v798
    %v1419 = vpack.c.b16 %v809, %v799
    %v1420 = vpack.c.b16 %v810, %v800
    %v1421 = vpack.c.b16 %v811, %v801
    %v1422 = vpack.c.b16 %v812, %v802
    %v1423 = vpack.c.b16 %v823, %v813
    %v1424 = vpack.c.b16 %v824, %v814
    %v1425 = vpack.c.b16 %v825, %v815
    %v1426 = vpack.c.b16 %v826, %v816
    %v1427 = vpack.c.b16 %v827, %v817
    %v1428 = vpack.c.b16 %v828, %v818
    %v1429 = vpack.c.b16 %v829, %v819
    %v1430 = vpack.c.b16 %v830, %v820
    %v1431 = vpack.c.b16 %v831, %v821
    %v1432 = vpack.c.b16 %v832, %v822
    %v1433 = vpack.c.b16 %v843, %v833
    %v1434 = vpack.c.b16 %v844, %v834
    %v1435 = vpack.c.b16 %v845, %v835
    %v1436 = vpack.c.b16 %v846, %v836
    %v1437 = vpack.c.b16 %v847, %v837
    %v1438 = vpack.c.b16 %v848, %v838
    %v1439 = vpack.c.b16 %v849, %v839
    %v1440 = vpack.c.b16 %v850, %v840
    %v1441 = vpack.c.b16 %v851, %v841
    %v1442 = vpack.c.b16 %v852, %v842
    %v1443 = vpack.c.b16 %v863, %v853
    %v1444 = vpack.c.b16 %v864, %v854
    %v1445 = vpack.c.b16 %v865, %v855
    %v1446 = vpack.c.b16 %v866, %v856
    %v1447 = vpack.c.b16 %v867, %v857
    %v1448 = vpack.c.b16 %v868, %v858
    %v1449 = vpack.c.b16 %v869, %v859
    %v1450 = vpack.c.b16 %v870, %v860
    %v1451 = vpack.c.b16 %v871, %v861
    %v1452 = vpack.c.b16 %v872, %v862
    %v1453 = vpack.c.b16 %v883, %v873
    %v1454 = vpack.c.b16 %v884, %v874
    %v1455 = vpack.c.b16 %v885, %v875
    %v1456 = vpack.c.b16 %v886, %v876
    %v1457 = vpack.c.b16 %v887, %v877
    %v1458 = vpack.c.b16 %v888, %v878
    %v1459 = vpack.c.b16 %v889, %v879
    %v1460 = vpack.c.b16 %v890, %v880
    %v1461 = vpack.c.b16 %v891, %v881
    %v1462 = vpack.c.b16 %v892, %v882
    %v1463 = vpack.c.b16 %v903, %v893
    %v1464 = vpack.c.b16 %v904, %v894
    %v1465 = vpack.c.b16 %v905, %v895
    %v1466 = vpack.c.b16 %v906, %v896
    %v1467 = vpack.c.b16 %v907, %v897
    %v1468 = vpack.c.b16 %v908, %v898
    %v1469 = vpack.c.b16 %v909, %v899
    %v1470 = vpack.c.b16 %v910, %v900
    %v1471 = vpack.c.b16 %v911, %v901
    %v1472 = vpack.c.b16 %v912, %v902
    %v1473 = vpack.c.b16 %v923, %v913
    %v1474 = vpack.c.b16 %v924, %v914
    %v1475 = vpack.c.b16 %v925, %v915
    %v1476 = vpack.c.b16 %v926, %v916
    %v1477 = vpack.c.b16 %v927, %v917
    %v1478 = vpack.c.b16 %v928, %v918
    %v1479 = vpack.c.b16 %v929, %v919
    %v1480 = vpack.c.b16 %v930, %v920
    %v1481 = vpack.c.b16 %v931, %v921
    %v1482 = vpack.c.b16 %v932, %v922
    %v1483 = vpack.c.b16 %v943, %v933
    %v1484 = vpack.c.b16 %v944, %v934
    %v1485 = vpack.c.b16 %v945, %v935
    %v1486 = vpack.c.b16 %v946, %v936
    %v1487 = vpack.c.b16 %v947, %v937
    %v1488 = vpack.c.b16 %v948, %v938
    %v1489 = vpack.c.b16 %v949, %v939
    %v1490 = vpack.c.b16 %v950, %v940
    %v1491 = vpack.c.b16 %v951, %v941
    %v1492 = vpack.c.b16 %v952, %v942
    %v1493 = vpack.c.b16 %v963, %v953
    %v1494 = vpack.c.b16 %v964, %v954
    %v1495 = vpack.c.b16 %v965, %v955
    %v1496 = vpack.c.b16 %v966, %v956
    %v1497 = vpack.c.b16 %v967, %v957
    %v1498 = vpack.c.b16 %v968, %v958
    %v1499 = vpack.c.b16 %v969, %v959
    %v1500 = vpack.c.b16 %v970, %v960
    %v1501 = vpack.c.b16 %v971, %v961
    %v1502 = vpack.c.b16 %v972, %v962
    %v1503 = vpack.c.b16 %v983, %v973
    %v1504 = vpack.c.b16 %v984, %v974
    %v1505 = vpack.c.b16 %v985, %v975
    %v1506 = vpack.c.b16 %v986, %v976
    %v1507 = vpack.c.b16 %v987, %v977
    %v1508 = vpack.c.b16 %v988, %v978
    %v1509 = vpack.c.b16 %v989, %v979
    %v1510 = vpack.c.b16 %v990, %v980
    %v1511 = vpack.c.b16 %v991, %v981
    %v1512 = vpack.c.b16 %v992, %v982
    %v1513 = vpack.c.b16 %v1003, %v993
    %v1514 = vpack.c.b16 %v1004, %v994
    %v1515 = vpack.c.b16 %v1005, %v995
    %v1516 = vpack.c.b16 %v1006, %v996
    %v1517 = vpack.c.b16 %v1007, %v997
    %v1518 = vpack.c.b16 %v1008, %v998
    %v1519 = vpack.c.b16 %v1009, %v999
    %v1520 = vpack.c.b16 %v1010, %v1000
    %v1521 = vpack.c.b16 %v1011, %v1001
    %v1522 = vpack.c.b16 %v1012, %v1002
    %v1523 = vpack.c.b16 %v1023, %v1013
    %v1524 = vpack.c.b16 %v1024, %v1014
    %v1525 = vpack.c.b16 %v1025, %v1015
    %v1526 = vpack.c.b16 %v1026, %v1016
    %v1527 = vpack.c.b16 %v1027, %v1017
    %v1528 = vpack.c.b16 %v1028, %v1018
    %v1529 = vpack.c.b16 %v1029, %v1019
    %v1530 = vpack.c.b16 %v1030, %v1020
    %v1531 = vpack.c.b16 %v1031, %v1021
    %v1532 = vpack.c.b16 %v1032, %v1022
    %v1533 = vpack.c.b16 %v1043, %v1033
    %v1534 = vpack.c.b16 %v1044, %v1034
    %v1535 = vpack.c.b16 %v1045, %v1035
    %v1536 = vpack.c.b16 %v1046, %v1036
    %v1537 = vpack.c.b16 %v1047, %v1037
    %v1538 = vpack.c.b16 %v1048, %v1038
    %v1539 = vpack.c.b16 %v1049, %v1039
    %v1540 = vpack.c.b16 %v1050, %v1040
    %v1541 = vpack.c.b16 %v1051, %v1041
    %v1542 = vpack.c.b16 %v1052, %v1042
    %v1543 = vpack.c.b16 %v1063, %v1053
    %v1544 = vpack.c.b16 %v1064, %v1054
    %v1545 = vpack.c.b16 %v1065, %v1055
    %v1546 = vpack.c.b16 %v1066, %v1056
    %v1547 = vpack.c.b16 %v1067, %v1057
    %v1548 = vpack.c.b16 %v1068, %v1058
    %v1549 = vpack.c.b16 %v1069, %v1059
    %v1550 = vpack.c.b16 %v1070, %v1060
    %v1551 = vpack.c.b16 %v1071, %v1061
    %v1552 = vpack.c.b16 %v1072, %v1062
    %v1553 = vpack.c.b16 %v1083, %v1073
    %v1554 = vpack.c.b16 %v1084, %v1074
    %v1555 = vpack.c.b16 %v1085, %v1075
    %v1556 = vpack.c.b16 %v1086, %v1076
    %v1557 = vpack.c.b16 %v1087, %v1077
    %v1558 = vpack.c.b16 %v1088, %v1078
    %v1559 = vpack.c.b16 %v1089, %v1079
    %v1560 = vpack.c.b16 %v1090, %v1080
    %v1561 = vpack.c.b16 %v1091, %v1081
    %v1562 = vpack.c.b16 %v1092, %v1082
    %v1563 = vpack.c.b16 %v1103, %v1093
    %v1564 = vpack.c.b16 %v1104, %v1094
    %v1565 = vpack.c.b16 %v1105, %v1095
    %v1566 = vpack.c.b16 %v1106, %v1096
    %v1567 = vpack.c.b16 %v1107, %v1097
    %v1568 = vpack.c.b16 %v1108, %v1098
    %v1569 = vpack.c.b16 %v1109, %v1099
    %v1570 = vpack.c.b16 %v1110, %v1100
    %v1571 = vpack.c.b16 %v1111, %v1101
    %v1572 = vpack.c.b16 %v1112, %v1102
    %v1573 = vpack.c.b16 %v1123, %v1113
    %v1574 = vpack.c.b16 %v1124, %v1114
    %v1575 = vpack.c.b16 %v1125, %v1115
    %v1576 = vpack.c.b16 %v1126, %v1116
    %v1577 = vpack.c.b16 %v1127, %v1117
    %v1578 = vpack.c.b16 %v1128, %v1118
    %v1579 = vpack.c.b16 %v1129, %v1119
    %v1580 = vpack.c.b16 %v1130, %v1120
    %v1581 = vpack.c.b16 %v1131, %v1121
    %v1582 = vpack.c.b16 %v1132, %v1122
    %v1583 = vpack.c.b16 %v1143, %v1133
    %v1584 = vpack.c.b16 %v1144, %v1134
    %v1585 = vpack.c.b16 %v1145, %v1135
    %v1586 = vpack.c.b16 %v1146, %v1136
    %v1587 = vpack.c.b16 %v1147, %v1137
    %v1588 = vpack.c.b16 %v1148, %v1138
    %v1589 = vpack.c.b16 %v1149, %v1139
    %v1590 = vpack.c.b16 %v1150, %v1140
    %v1591 = vpack.c.b16 %v1151, %v1141
    %v1592 = vpack.c.b16 %v1152, %v1142
    %v1593 = vpack.c.b16 %v1163, %v1153
    %v1594 = vpack.c.b16 %v1164, %v1154
    %v1595 = vpack.c.b16 %v1165, %v1155
    %v1596 = vpack.c.b16 %v1166, %v1156
    %v1597 = vpack.c.b16 %v1167, %v1157
    %v1598 = vpack.c.b16 %v1168, %v1158
    %v1599 = vpack.c.b16 %v1169, %v1159
    %v1600 = vpack.c.b16 %v1170, %v1160
    %v1601 = vpack.c.b16 %v1171, %v1161
    %v1602 = vpack.c.b16 %v1172, %v1162
    %v1603 = vpack.c.b16 %v1183, %v1173
    %v1604 = vpack.c.b16 %v1184, %v1174
    %v1605 = vpack.c.b16 %v1185, %v1175
    %v1606 = vpack.c.b16 %v1186, %v1176
    %v1607 = vpack.c.b16 %v1187, %v1177
    %v1608 = vpack.c.b16 %v1188, %v1178
    %v1609 = vpack.c.b16 %v1189, %v1179
    %v1610 = vpack.c.b16 %v1190, %v1180
    %v1611 = vpack.c.b16 %v1191, %v1181
    %v1612 = vpack.c.b16 %v1192, %v1182
    %v1613 = vpack.c.b16 %v1203, %v1193
    %v1614 = vpack.c.b16 %v1204, %v1194
    %v1615 = vpack.c.b16 %v1205, %v1195
    %v1616 = vpack.c.b16 %v1206, %v1196
    %v1617 = vpack.c.b16 %v1207, %v1197
    %v1618 = vpack.c.b16 %v1208, %v1198
    %v1619 = vpack.c.b16 %v1209, %v1199
    %v1620 = vpack.c.b16 %v1210, %v1200
    %v1621 = vpack.c.b16 %v1211, %v1201
    %v1622 = vpack.c.b16 %v1212, %v1202
    %v1623 = vpack.c.b16 %v1223, %v1213
    %v1624 = vpack.c.b16 %v1224, %v1214
    %v1625 = vpack.c.b16 %v1225, %v1215
    %v1626 = vpack.c.b16 %v1226, %v1216
    %v1627 = vpack.c.b16 %v1227, %v1217
    %v1628 = vpack.c.b16 %v1228, %v1218
    %v1629 = vpack.c.b16 %v1229, %v1219
    %v1630 = vpack.c.b16 %v1230, %v1220
    %v1631 = vpack.c.b16 %v1231, %v1221
    %v1632 = vpack.c.b16 %v1232, %v1222
    %v1633 = vpack.c.b16 %v1243, %v1233
    %v1634 = vpack.c.b16 %v1244, %v1234
    %v1635 = vpack.c.b16 %v1245, %v1235
    %v1636 = vpack.c.b16 %v1246, %v1236
    %v1637 = vpack.c.b16 %v1247, %v1237
    %v1638 = vpack.c.b16 %v1248, %v1238
    %v1639 = vpack.c.b16 %v1249, %v1239
    %v1640 = vpack.c.b16 %v1250, %v1240
    %v1641 = vpack.c.b16 %v1251, %v1241
    %v1642 = vpack.c.b16 %v1252, %v1242
    %v1643 = vpack.c.b16 %v1263, %v1253
    %v1644 = vpack.c.b16 %v1264, %v1254
    %v1645 = vpack.c.b16 %v1265, %v1255
    %v1646 = vpack.c.b16 %v1266, %v1256
    %v1647 = vpack.c.b16 %v1267, %v1257
    %v1648 = vpack.c.b16 %v1268, %v1258
    %v1649 = vpack.c.b16 %v1269, %v1259
    %v1650 = vpack.c.b16 %v1270, %v1260
    %v1651 = vpack.c.b16 %v1271, %v1261
    %v1652 = vpack.c.b16 %v1272, %v1262
    %v1653 = vpack.c.b16 %v1283, %v1273
    %v1654 = vpack.c.b16 %v1284, %v1274
    %v1655 = vpack.c.b16 %v1285, %v1275
    %v1656 = vpack.c.b16 %v1286, %v1276
    %v1657 = vpack.c.b16 %v1287, %v1277
    %v1658 = vpack.c.b16 %v1288, %v1278
    %v1659 = vpack.c.b16 %v1289, %v1279
    %v1660 = vpack.c.b16 %v1290, %v1280
    %v1661 = vpack.c.b16 %v1291, %v1281
    %v1662 = vpack.c.b16 %v1292, %v1282
    %v1663 = vpack.c.b16 %v1303, %v1293
    %v1664 = vpack.c.b16 %v1304, %v1294
    %v1665 = vpack.c.b16 %v1305, %v1295
    %v1666 = vpack.c.b16 %v1306, %v1296
    %v1667 = vpack.c.b16 %v1307, %v1297
    %v1668 = vpack.c.b16 %v1308, %v1298
    %v1669 = vpack.c.b16 %v1309, %v1299
    %v1670 = vpack.c.b16 %v1310, %v1300
    %v1671 = vpack.c.b16 %v1311, %v1301
    %v1672 = vpack.c.b16 %v1312, %v1302
    %v1673 = vpack.c.b16 %v1323, %v1313
    %v1674 = vpack.c.b16 %v1324, %v1314
    %v1675 = vpack.c.b16 %v1325, %v1315
    %v1676 = vpack.c.b16 %v1326, %v1316
    %v1677 = vpack.c.b16 %v1327, %v1317
    %v1678 = vpack.c.b16 %v1328, %v1318
    %v1679 = vpack.c.b16 %v1329, %v1319
    %v1680 = vpack.c.b16 %v1330, %v1320
    %v1681 = vpack.c.b16 %v1331, %v1321
    %v1682 = vpack.c.b16 %v1332, %v1322
    %v1683 = vpack.c.b16 %v1343, %v1333
    %v1684 = vpack.c.b16 %v1344, %v1334
    %v1685 = vpack.c.b16 %v1345, %v1335
    %v1686 = vpack.c.b16 %v1346, %v1336
    %v1687 = vpack.c.b16 %v1347, %v1337
    %v1688 = vpack.c.b16 %v1348, %v1338
    %v1689 = vpack.c.b16 %v1349, %v1339
    %v1690 = vpack.c.b16 %v1350, %v1340
    %v1691 = vpack.c.b16 %v1351, %v1341
    %v1692 = vpack.c.b16 %v1352, %v1342
    %v1693 = vpack.c.b16 %v1363, %v1353
    %v1694 = vpack.c.b16 %v1364, %v1354
    %v1695 = vpack.c.b16 %v1365, %v1355
    %v1696 = vpack.c.b16 %v1366, %v1356
    %v1697 = vpack.c.b16 %v1367, %v1357
    %v1698 = vpack.c.b16 %v1368, %v1358
    %v1699 = vpack.c.b16 %v1369, %v1359
    %v1700 = vpack.c.b16 %v1370, %v1360
    %v1701 = vpack.c.b16 %v1371, %v1361
    %v1702 = vpack.c.b16 %v1372, %v1362
    %v1703 = vpack.c.b16 %v1383, %v1373
    %v1704 = vpack.c.b16 %v1384, %v1374
    %v1705 = vpack.c.b16 %v1385, %v1375
    %v1706 = vpack.c.b16 %v1386, %v1376
    %v1707 = vpack.c.b16 %v1387, %v1377
    %v1708 = vpack.c.b16 %v1388, %v1378
    %v1709 = vpack.c.b16 %v1389, %v1379
    %v1710 = vpack.c.b16 %v1390, %v1380
    %v1711 = vpack.c.b16 %v1391, %v1381
    %v1712 = vpack.c.b16 %v1392, %v1382
    %2033 = vmatprep.subr.bf16.mxu0 %v1394
    %2034 = vmatpush1.bf16.msra.mxu0 %v1393
    %2035 = vmatprep.subr.bf16.mxu0 %v1404
    %2036 = vmatpush1.bf16.msra.mxu0 %v1403
    %2037 = vmatprep.subr.bf16.mxu0 %v1414
    %2038 = vmatpush1.bf16.msra.mxu0 %v1413
    %2039 = vmatprep.subr.bf16.mxu0 %v1424
    %2040 = vmatpush1.bf16.msra.mxu0 %v1423
    %2041 = vmatprep.subr.bf16.mxu0 %v1434
    %2042 = vmatpush1.bf16.msra.mxu0 %v1433
    %2043 = vmatprep.subr.bf16.mxu0 %v1444
    %2044 = vmatpush1.bf16.msra.mxu0 %v1443
    %2045 = vmatprep.subr.bf16.mxu0 %v1454
    %2046 = vmatpush1.bf16.msra.mxu0 %v1453
    %2047 = vmatprep.subr.bf16.mxu0 %v1464
    %2048 = vmatpush1.bf16.msra.mxu0 %v1463
    %2049 = vmatprep.subr.bf16.mxu0 %v1474
    %2050 = vmatpush1.bf16.msra.mxu0 %v1473
    %2051 = vmatprep.subr.bf16.mxu0 %v1484
    %2052 = vmatpush1.bf16.msra.mxu0 %v1483
    %2053 = vmatprep.subr.bf16.mxu0 %v1494
    %2054 = vmatpush1.bf16.msra.mxu0 %v1493
    %2055 = vmatprep.subr.bf16.mxu0 %v1504
    %2056 = vmatpush1.bf16.msra.mxu0 %v1503
    %2057 = vmatprep.subr.bf16.mxu0 %v1514
    %2058 = vmatpush1.bf16.msra.mxu0 %v1513
    %2059 = vmatprep.subr.bf16.mxu0 %v1524
    %2060 = vmatpush1.bf16.msra.mxu0 %v1523
    %2061 = vmatprep.subr.bf16.mxu0 %v1534
    %2062 = vmatpush1.bf16.msra.mxu0 %v1533
    %2063 = vmatprep.subr.bf16.mxu0 %v1544
    %2064 = vmatpush1.bf16.msra.mxu0 %v1543
    %2065 = vmatprep.mubr.bf16.mxu0 %v98
    %2066 = vmatmul.mubr.bf16.gmra.mrb[0].mxu0 %v97
    %v2067 = vpop.f32.mrb[0].mxu0
    %v2068 = vadd.f32 0.0, %v2067
    %v2069 = vpop.f32.mrb[0].mxu0
    %v2070 = vadd.f32 0.0, %v2069
    %v2071 = vpop.f32.mrb[0].mxu0
    %v2072 = vadd.f32 0.0, %v2071
    %v2073 = vpop.f32.mrb[0].mxu0
    %v2074 = vadd.f32 0.0, %v2073
    %2075 = vmatprep.mubr.bf16.mxu0 %v102
    %2076 = vmatmul.mubr.bf16.gmra.mrb[0].mxu0 %v101
    %v2077 = vpop.f32.mrb[0].mxu0
    %v2078 = vadd.f32 0.0, %v2077
    %v2079 = vpop.f32.mrb[0].mxu0
    %v2080 = vadd.f32 0.0, %v2079
    %v2081 = vpop.f32.mrb[0].mxu0
    %v2082 = vadd.f32 0.0, %v2081
    %v2083 = vpop.f32.mrb[0].mxu0
    %v2084 = vadd.f32 0.0, %v2083
    %2085 = vmatprep.mubr.bf16.mxu0 %v106
    %2086 = vmatmul.mubr.bf16.gmra.mrb[0].mxu0 %v105
    %v2087 = vpop.f32.mrb[0].mxu0
    %v2088 = vadd.f32 0.0, %v2087
    %v2089 = vpop.f32.mrb[0].mxu0
    %v2090 = vadd.f32 0.0, %v2089
    %v2091 = vpop.f32.mrb[0].mxu0
    %v2092 = vadd.f32 0.0, %v2091
    %v2093 = vpop.f32.mrb[0].mxu0
    %v2094 = vadd.f32 0.0, %v2093
    %2095 = vmatprep.mubr.bf16.mxu0 %v110
    %2096 = vmatmul.mubr.bf16.gmra.mrb[0].mxu0 %v109
    %v2097 = vpop.f32.mrb[0].mxu0
    %v2098 = vadd.f32 0.0, %v2097
    %v2099 = vpop.f32.mrb[0].mxu0
    %v2100 = vadd.f32 0.0, %v2099
    %v2101 = vpop.f32.mrb[0].mxu0
    %v2102 = vpop.f32.mrb[0].mxu0
    %2103 = vdwg.mxu0
    %2104 = vmatprep.subr.bf16.mxu0 %v1554
    %2105 = vmatpush1.bf16.msra.mxu0 %v1553
    %2106 = vmatprep.subr.bf16.mxu0 %v1564
    %2107 = vmatpush1.bf16.msra.mxu0 %v1563
    %2108 = vmatprep.subr.bf16.mxu0 %v1574
    %2109 = vmatpush1.bf16.msra.mxu0 %v1573
    %2110 = vmatprep.subr.bf16.mxu0 %v1584
    %2111 = vmatpush1.bf16.msra.mxu0 %v1583
    %2112 = vmatprep.subr.bf16.mxu0 %v1594
    %2113 = vmatpush1.bf16.msra.mxu0 %v1593
    %2114 = vmatprep.subr.bf16.mxu0 %v1604
    %2115 = vmatpush1.bf16.msra.mxu0 %v1603
    %2116 = vmatprep.subr.bf16.mxu0 %v1614
    %2117 = vmatpush1.bf16.msra.mxu0 %v1613
    %2118 = vmatprep.subr.bf16.mxu0 %v1624
    %2119 = vmatpush1.bf16.msra.mxu0 %v1623
    %2120 = vmatprep.subr.bf16.mxu0 %v1634
    %2121 = vmatpush1.bf16.msra.mxu0 %v1633
    %2122 = vmatprep.subr.bf16.mxu0 %v1644
    %2123 = vmatpush1.bf16.msra.mxu0 %v1643
    %2124 = vmatprep.subr.bf16.mxu0 %v1654
    %2125 = vmatpush1.bf16.msra.mxu0 %v1653
    %2126 = vmatprep.subr.bf16.mxu0 %v1664
    %2127 = vmatpush1.bf16.msra.mxu0 %v1663
    %2128 = vmatprep.subr.bf16.mxu0 %v1674
    %2129 = vmatpush1.bf16.msra.mxu0 %v1673
    %2130 = vmatprep.subr.bf16.mxu0 %v1684
    %2131 = vmatpush1.bf16.msra.mxu0 %v1683
    %2132 = vmatprep.subr.bf16.mxu0 %v1694
    %2133 = vmatpush1.bf16.msra.mxu0 %v1693
    %2134 = vmatprep.subr.bf16.mxu0 %v1704
    %2135 = vmatpush1.bf16.msra.mxu0 %v1703
    %2136 = vmatprep.mubr.bf16.mxu0 %v100
    %2137 = vmatmul.mubr.bf16.gmra.mrb[0].mxu0 %v99
    %v2138 = vpop.f32.mrb[0].mxu0
    %v2139 = vadd.f32 %v2068, %v2138
    %v2140 = vpop.f32.mrb[0].mxu0
    %v2141 = vadd.f32 %v2070, %v2140
    %v2142 = vpop.f32.mrb[0].mxu0
    %v2143 = vadd.f32 %v2072, %v2142
    %v2144 = vpop.f32.mrb[0].mxu0
    %v2145 = vadd.f32 %v2074, %v2144
    %2146 = vmatprep.mubr.bf16.mxu0 %v104
    %2147 = vmatmul.mubr.bf16.gmra.mrb[0].mxu0 %v103
    %v2148 = vpop.f32.mrb[0].mxu0
    %v2149 = vadd.f32 %v2078, %v2148
    %v2150 = vpop.f32.mrb[0].mxu0
    %v2151 = vadd.f32 %v2080, %v2150
    %v2152 = vpop.f32.mrb[0].mxu0
    %v2153 = vadd.f32 %v2082, %v2152
    %v2154 = vpop.f32.mrb[0].mxu0
    %v2155 = vadd.f32 %v2084, %v2154
    %2156 = vmatprep.mubr.bf16.mxu0 %v108
    %2157 = vmatmul.mubr.bf16.gmra.mrb[0].mxu0 %v107
    %v2158 = vpop.f32.mrb[0].mxu0
    %v2159 = vadd.f32 %v2088, %v2158
    %v2160 = vpop.f32.mrb[0].mxu0
    %v2161 = vadd.f32 %v2090, %v2160
    %v2162 = vpop.f32.mrb[0].mxu0
    %v2163 = vadd.f32 %v2092, %v2162
    %v2164 = vpop.f32.mrb[0].mxu0
    %v2165 = vadd.f32 %v2094, %v2164
    %2166 = vmatprep.mubr.bf16.mxu0 %v112
    %2167 = vmatmul.mubr.bf16.gmra.mrb[0].mxu0 %v111
    %v2168 = vpop.f32.mrb[0].mxu0
    %v2169 = vadd.f32 %v2098, %v2168
    %v2170 = vpop.f32.mrb[0].mxu0
    %v2171 = vadd.f32 %v2100, %v2170
    %v2172 = vpop.f32.mrb[0].mxu0
    %v2173 = vpop.f32.mrb[0].mxu0
    %2174 = vdwg.mxu0
    %2175 = vmatprep.subr.bf16.mxu0 %v1396
    %2176 = vmatpush1.bf16.msra.mxu0 %v1395
    %2177 = vmatprep.subr.bf16.mxu0 %v1406
    %2178 = vmatpush1.bf16.msra.mxu0 %v1405
    %2179 = vmatprep.subr.bf16.mxu0 %v1416
    %2180 = vmatpush1.bf16.msra.mxu0 %v1415
    %2181 = vmatprep.subr.bf16.mxu0 %v1426
    %2182 = vmatpush1.bf16.msra.mxu0 %v1425
    %2183 = vmatprep.subr.bf16.mxu0 %v1436
    %2184 = vmatpush1.bf16.msra.mxu0 %v1435
    %2185 = vmatprep.subr.bf16.mxu0 %v1446
    %2186 = vmatpush1.bf16.msra.mxu0 %v1445
    %2187 = vmatprep.subr.bf16.mxu0 %v1456
    %2188 = vmatpush1.bf16.msra.mxu0 %v1455
    %2189 = vmatprep.subr.bf16.mxu0 %v1466
    %2190 = vmatpush1.bf16.msra.mxu0 %v1465
    %2191 = vmatprep.subr.bf16.mxu0 %v1476
    %2192 = vmatpush1.bf16.msra.mxu0 %v1475
    %2193 = vmatprep.subr.bf16.mxu0 %v1486
    %2194 = vmatpush1.bf16.msra.mxu0 %v1485
    %2195 = vmatprep.subr.bf16.mxu0 %v1496
    %2196 = vmatpush1.bf16.msra.mxu0 %v1495
    %2197 = vmatprep.subr.bf16.mxu0 %v1506
    %2198 = vmatpush1.bf16.msra.mxu0 %v1505
    %2199 = vmatprep.subr.bf16.mxu0 %v1516
    %2200 = vmatpush1.bf16.msra.mxu0 %v1515
    %2201 = vmatprep.subr.bf16.mxu0 %v1526
    %2202 = vmatpush1.bf16.msra.mxu0 %v1525
    %2203 = vmatprep.subr.bf16.mxu0 %v1536
    %2204 = vmatpush1.bf16.msra.mxu0 %v1535
    %2205 = vmatprep.subr.bf16.mxu0 %v1546
    %2206 = vmatpush1.bf16.msra.mxu0 %v1545
    %2207 = vmatprep.mubr.bf16.mxu0 %v98
    %2208 = vmatmul.mubr.bf16.gmra.mrb[0].mxu0 %v97
    %v2209 = vpop.f32.mrb[0].mxu0
    %v2210 = vadd.f32 0.0, %v2209
    %v2211 = vpop.f32.mrb[0].mxu0
    %v2212 = vadd.f32 0.0, %v2211
    %v2213 = vpop.f32.mrb[0].mxu0
    %v2214 = vadd.f32 0.0, %v2213
    %v2215 = vpop.f32.mrb[0].mxu0
    %v2216 = vadd.f32 0.0, %v2215
    %2217 = vmatprep.mubr.bf16.mxu0 %v102
    %2218 = vmatmul.mubr.bf16.gmra.mrb[0].mxu0 %v101
    %v2219 = vpop.f32.mrb[0].mxu0
    %v2220 = vadd.f32 0.0, %v2219
    %v2221 = vpop.f32.mrb[0].mxu0
    %v2222 = vadd.f32 0.0, %v2221
    %v2223 = vpop.f32.mrb[0].mxu0
    %v2224 = vadd.f32 0.0, %v2223
    %v2225 = vpop.f32.mrb[0].mxu0
    %v2226 = vadd.f32 0.0, %v2225
    %2227 = vmatprep.mubr.bf16.mxu0 %v106
    %2228 = vmatmul.mubr.bf16.gmra.mrb[0].mxu0 %v105
    %v2229 = vpop.f32.mrb[0].mxu0
    %v2230 = vadd.f32 0.0, %v2229
    %v2231 = vpop.f32.mrb[0].mxu0
    %v2232 = vadd.f32 0.0, %v2231
    %v2233 = vpop.f32.mrb[0].mxu0
    %v2234 = vadd.f32 0.0, %v2233
    %v2235 = vpop.f32.mrb[0].mxu0
    %v2236 = vadd.f32 0.0, %v2235
    %2237 = vmatprep.mubr.bf16.mxu0 %v110
    %2238 = vmatmul.mubr.bf16.gmra.mrb[0].mxu0 %v109
    %v2239 = vpop.f32.mrb[0].mxu0
    %v2240 = vadd.f32 0.0, %v2239
    %v2241 = vpop.f32.mrb[0].mxu0
    %v2242 = vadd.f32 0.0, %v2241
    %v2243 = vpop.f32.mrb[0].mxu0
    %v2244 = vpop.f32.mrb[0].mxu0
    %2245 = vdwg.mxu0
    %2246 = vmatprep.subr.bf16.mxu0 %v1556
    %2247 = vmatpush1.bf16.msra.mxu0 %v1555
    %2248 = vmatprep.subr.bf16.mxu0 %v1566
    %2249 = vmatpush1.bf16.msra.mxu0 %v1565
    %2250 = vmatprep.subr.bf16.mxu0 %v1576
    %2251 = vmatpush1.bf16.msra.mxu0 %v1575
    %2252 = vmatprep.subr.bf16.mxu0 %v1586
    %2253 = vmatpush1.bf16.msra.mxu0 %v1585
    %2254 = vmatprep.subr.bf16.mxu0 %v1596
    %2255 = vmatpush1.bf16.msra.mxu0 %v1595
    %2256 = vmatprep.subr.bf16.mxu0 %v1606
    %2257 = vmatpush1.bf16.msra.mxu0 %v1605
    %2258 = vmatprep.subr.bf16.mxu0 %v1616
    %2259 = vmatpush1.bf16.msra.mxu0 %v1615
    %2260 = vmatprep.subr.bf16.mxu0 %v1626
    %2261 = vmatpush1.bf16.msra.mxu0 %v1625
    %2262 = vmatprep.subr.bf16.mxu0 %v1636
    %2263 = vmatpush1.bf16.msra.mxu0 %v1635
    %2264 = vmatprep.subr.bf16.mxu0 %v1646
    %2265 = vmatpush1.bf16.msra.mxu0 %v1645
    %2266 = vmatprep.subr.bf16.mxu0 %v1656
    %2267 = vmatpush1.bf16.msra.mxu0 %v1655
    %2268 = vmatprep.subr.bf16.mxu0 %v1666
    %2269 = vmatpush1.bf16.msra.mxu0 %v1665
    %2270 = vmatprep.subr.bf16.mxu0 %v1676
    %2271 = vmatpush1.bf16.msra.mxu0 %v1675
    %2272 = vmatprep.subr.bf16.mxu0 %v1686
    %2273 = vmatpush1.bf16.msra.mxu0 %v1685
    %2274 = vmatprep.subr.bf16.mxu0 %v1696
    %2275 = vmatpush1.bf16.msra.mxu0 %v1695
    %2276 = vmatprep.subr.bf16.mxu0 %v1706
    %2277 = vmatpush1.bf16.msra.mxu0 %v1705
    %2278 = vmatprep.mubr.bf16.mxu0 %v100
    %2279 = vmatmul.mubr.bf16.gmra.mrb[0].mxu0 %v99
    %v2280 = vpop.f32.mrb[0].mxu0
    %v2281 = vadd.f32 %v2210, %v2280
    %v2282 = vpop.f32.mrb[0].mxu0
    %v2283 = vadd.f32 %v2212, %v2282
    %v2284 = vpop.f32.mrb[0].mxu0
    %v2285 = vadd.f32 %v2214, %v2284
    %v2286 = vpop.f32.mrb[0].mxu0
    %v2287 = vadd.f32 %v2216, %v2286
    %2288 = vmatprep.mubr.bf16.mxu0 %v104
    %2289 = vmatmul.mubr.bf16.gmra.mrb[0].mxu0 %v103
    %v2290 = vpop.f32.mrb[0].mxu0
    %v2291 = vadd.f32 %v2220, %v2290
    %v2292 = vpop.f32.mrb[0].mxu0
    %v2293 = vadd.f32 %v2222, %v2292
    %v2294 = vpop.f32.mrb[0].mxu0
    %v2295 = vadd.f32 %v2224, %v2294
    %v2296 = vpop.f32.mrb[0].mxu0
    %v2297 = vadd.f32 %v2226, %v2296
    %2298 = vmatprep.mubr.bf16.mxu0 %v108
    %2299 = vmatmul.mubr.bf16.gmra.mrb[0].mxu0 %v107
    %v2300 = vpop.f32.mrb[0].mxu0
    %v2301 = vadd.f32 %v2230, %v2300
    %v2302 = vpop.f32.mrb[0].mxu0
    %v2303 = vadd.f32 %v2232, %v2302
    %v2304 = vpop.f32.mrb[0].mxu0
    %v2305 = vadd.f32 %v2234, %v2304
    %v2306 = vpop.f32.mrb[0].mxu0
    %v2307 = vadd.f32 %v2236, %v2306
    %2308 = vmatprep.mubr.bf16.mxu0 %v112
    %2309 = vmatmul.mubr.bf16.gmra.mrb[0].mxu0 %v111
    %v2310 = vpop.f32.mrb[0].mxu0
    %v2311 = vadd.f32 %v2240, %v2310
    %v2312 = vpop.f32.mrb[0].mxu0
    %v2313 = vadd.f32 %v2242, %v2312
    %v2314 = vpop.f32.mrb[0].mxu0
    %v2315 = vpop.f32.mrb[0].mxu0
    %2316 = vdwg.mxu0
    %2317 = vmatprep.subr.bf16.mxu0 %v1398
    %2318 = vmatpush1.bf16.msra.mxu0 %v1397
    %2319 = vmatprep.subr.bf16.mxu0 %v1408
    %2320 = vmatpush1.bf16.msra.mxu0 %v1407
    %2321 = vmatprep.subr.bf16.mxu0 %v1418
    %2322 = vmatpush1.bf16.msra.mxu0 %v1417
    %2323 = vmatprep.subr.bf16.mxu0 %v1428
    %2324 = vmatpush1.bf16.msra.mxu0 %v1427
    %2325 = vmatprep.subr.bf16.mxu0 %v1438
    %2326 = vmatpush1.bf16.msra.mxu0 %v1437
    %2327 = vmatprep.subr.bf16.mxu0 %v1448
    %2328 = vmatpush1.bf16.msra.mxu0 %v1447
    %2329 = vmatprep.subr.bf16.mxu0 %v1458
    %2330 = vmatpush1.bf16.msra.mxu0 %v1457
    %2331 = vmatprep.subr.bf16.mxu0 %v1468
    %2332 = vmatpush1.bf16.msra.mxu0 %v1467
    %2333 = vmatprep.subr.bf16.mxu0 %v1478
    %2334 = vmatpush1.bf16.msra.mxu0 %v1477
    %2335 = vmatprep.subr.bf16.mxu0 %v1488
    %2336 = vmatpush1.bf16.msra.mxu0 %v1487
    %2337 = vmatprep.subr.bf16.mxu0 %v1498
    %2338 = vmatpush1.bf16.msra.mxu0 %v1497
    %2339 = vmatprep.subr.bf16.mxu0 %v1508
    %2340 = vmatpush1.bf16.msra.mxu0 %v1507
    %2341 = vmatprep.subr.bf16.mxu0 %v1518
    %2342 = vmatpush1.bf16.msra.mxu0 %v1517
    %2343 = vmatprep.subr.bf16.mxu0 %v1528
    %2344 = vmatpush1.bf16.msra.mxu0 %v1527
    %2345 = vmatprep.subr.bf16.mxu0 %v1538
    %2346 = vmatpush1.bf16.msra.mxu0 %v1537
    %2347 = vmatprep.subr.bf16.mxu0 %v1548
    %2348 = vmatpush1.bf16.msra.mxu0 %v1547
    %2349 = vmatprep.mubr.bf16.mxu0 %v98
    %2350 = vmatmul.mubr.bf16.gmra.mrb[0].mxu0 %v97
    %v2351 = vpop.f32.mrb[0].mxu0
    %v2352 = vadd.f32 0.0, %v2351
    %v2353 = vpop.f32.mrb[0].mxu0
    %v2354 = vadd.f32 0.0, %v2353
    %v2355 = vpop.f32.mrb[0].mxu0
    %v2356 = vadd.f32 0.0, %v2355
    %v2357 = vpop.f32.mrb[0].mxu0
    %v2358 = vadd.f32 0.0, %v2357
    %2359 = vmatprep.mubr.bf16.mxu0 %v102
    %2360 = vmatmul.mubr.bf16.gmra.mrb[0].mxu0 %v101
    %v2361 = vpop.f32.mrb[0].mxu0
    %v2362 = vadd.f32 0.0, %v2361
    %v2363 = vpop.f32.mrb[0].mxu0
    %v2364 = vadd.f32 0.0, %v2363
    %v2365 = vpop.f32.mrb[0].mxu0
    %v2366 = vadd.f32 0.0, %v2365
    %v2367 = vpop.f32.mrb[0].mxu0
    %v2368 = vadd.f32 0.0, %v2367
    %2369 = vmatprep.mubr.bf16.mxu0 %v106
    %2370 = vmatmul.mubr.bf16.gmra.mrb[0].mxu0 %v105
    %v2371 = vpop.f32.mrb[0].mxu0
    %v2372 = vadd.f32 0.0, %v2371
    %v2373 = vpop.f32.mrb[0].mxu0
    %v2374 = vadd.f32 0.0, %v2373
    %v2375 = vpop.f32.mrb[0].mxu0
    %v2376 = vadd.f32 0.0, %v2375
    %v2377 = vpop.f32.mrb[0].mxu0
    %v2378 = vadd.f32 0.0, %v2377
    %2379 = vmatprep.mubr.bf16.mxu0 %v110
    %2380 = vmatmul.mubr.bf16.gmra.mrb[0].mxu0 %v109
    %v2381 = vpop.f32.mrb[0].mxu0
    %v2382 = vadd.f32 0.0, %v2381
    %v2383 = vpop.f32.mrb[0].mxu0
    %v2384 = vadd.f32 0.0, %v2383
    %v2385 = vpop.f32.mrb[0].mxu0
    %v2386 = vpop.f32.mrb[0].mxu0
    %2387 = vdwg.mxu0
    %2388 = vmatprep.subr.bf16.mxu0 %v1558
    %2389 = vmatpush1.bf16.msra.mxu0 %v1557
    %2390 = vmatprep.subr.bf16.mxu0 %v1568
    %2391 = vmatpush1.bf16.msra.mxu0 %v1567
    %2392 = vmatprep.subr.bf16.mxu0 %v1578
    %2393 = vmatpush1.bf16.msra.mxu0 %v1577
    %2394 = vmatprep.subr.bf16.mxu0 %v1588
    %2395 = vmatpush1.bf16.msra.mxu0 %v1587
    %2396 = vmatprep.subr.bf16.mxu0 %v1598
    %2397 = vmatpush1.bf16.msra.mxu0 %v1597
    %2398 = vmatprep.subr.bf16.mxu0 %v1608
    %2399 = vmatpush1.bf16.msra.mxu0 %v1607
    %2400 = vmatprep.subr.bf16.mxu0 %v1618
    %2401 = vmatpush1.bf16.msra.mxu0 %v1617
    %2402 = vmatprep.subr.bf16.mxu0 %v1628
    %2403 = vmatpush1.bf16.msra.mxu0 %v1627
    %2404 = vmatprep.subr.bf16.mxu0 %v1638
    %2405 = vmatpush1.bf16.msra.mxu0 %v1637
    %2406 = vmatprep.subr.bf16.mxu0 %v1648
    %2407 = vmatpush1.bf16.msra.mxu0 %v1647
    %2408 = vmatprep.subr.bf16.mxu0 %v1658
    %2409 = vmatpush1.bf16.msra.mxu0 %v1657
    %2410 = vmatprep.subr.bf16.mxu0 %v1668
    %2411 = vmatpush1.bf16.msra.mxu0 %v1667
    %2412 = vmatprep.subr.bf16.mxu0 %v1678
    %2413 = vmatpush1.bf16.msra.mxu0 %v1677
    %2414 = vmatprep.subr.bf16.mxu0 %v1688
    %2415 = vmatpush1.bf16.msra.mxu0 %v1687
    %2416 = vmatprep.subr.bf16.mxu0 %v1698
    %2417 = vmatpush1.bf16.msra.mxu0 %v1697
    %2418 = vmatprep.subr.bf16.mxu0 %v1708
    %2419 = vmatpush1.bf16.msra.mxu0 %v1707
    %2420 = vmatprep.mubr.bf16.mxu0 %v100
    %2421 = vmatmul.mubr.bf16.gmra.mrb[0].mxu0 %v99
    %v2422 = vpop.f32.mrb[0].mxu0
    %v2423 = vadd.f32 %v2352, %v2422
    %v2424 = vpop.f32.mrb[0].mxu0
    %v2425 = vadd.f32 %v2354, %v2424
    %v2426 = vpop.f32.mrb[0].mxu0
    %v2427 = vadd.f32 %v2356, %v2426
    %v2428 = vpop.f32.mrb[0].mxu0
    %v2429 = vadd.f32 %v2358, %v2428
    %2430 = vmatprep.mubr.bf16.mxu0 %v104
    %2431 = vmatmul.mubr.bf16.gmra.mrb[0].mxu0 %v103
    %v2432 = vpop.f32.mrb[0].mxu0
    %v2433 = vadd.f32 %v2362, %v2432
    %v2434 = vpop.f32.mrb[0].mxu0
    %v2435 = vadd.f32 %v2364, %v2434
    %v2436 = vpop.f32.mrb[0].mxu0
    %v2437 = vadd.f32 %v2366, %v2436
    %v2438 = vpop.f32.mrb[0].mxu0
    %v2439 = vadd.f32 %v2368, %v2438
    %2440 = vmatprep.mubr.bf16.mxu0 %v108
    %2441 = vmatmul.mubr.bf16.gmra.mrb[0].mxu0 %v107
    %v2442 = vpop.f32.mrb[0].mxu0
    %v2443 = vadd.f32 %v2372, %v2442
    %v2444 = vpop.f32.mrb[0].mxu0
    %v2445 = vadd.f32 %v2374, %v2444
    %v2446 = vpop.f32.mrb[0].mxu0
    %v2447 = vadd.f32 %v2376, %v2446
    %v2448 = vpop.f32.mrb[0].mxu0
    %v2449 = vadd.f32 %v2378, %v2448
    %2450 = vmatprep.mubr.bf16.mxu0 %v112
    %2451 = vmatmul.mubr.bf16.gmra.mrb[0].mxu0 %v111
    %v2452 = vpop.f32.mrb[0].mxu0
    %v2453 = vadd.f32 %v2382, %v2452
    %v2454 = vpop.f32.mrb[0].mxu0
    %v2455 = vadd.f32 %v2384, %v2454
    %v2456 = vpop.f32.mrb[0].mxu0
    %v2457 = vpop.f32.mrb[0].mxu0
    %2458 = vdwg.mxu0
    %2459 = vmatprep.subr.bf16.mxu0 %v1400
    %2460 = vmatpush1.bf16.msra.mxu0 %v1399
    %2461 = vmatprep.subr.bf16.mxu0 %v1410
    %2462 = vmatpush1.bf16.msra.mxu0 %v1409
    %2463 = vmatprep.subr.bf16.mxu0 %v1420
    %2464 = vmatpush1.bf16.msra.mxu0 %v1419
    %2465 = vmatprep.subr.bf16.mxu0 %v1430
    %2466 = vmatpush1.bf16.msra.mxu0 %v1429
    %2467 = vmatprep.subr.bf16.mxu0 %v1440
    %2468 = vmatpush1.bf16.msra.mxu0 %v1439
    %2469 = vmatprep.subr.bf16.mxu0 %v1450
    %2470 = vmatpush1.bf16.msra.mxu0 %v1449
    %2471 = vmatprep.subr.bf16.mxu0 %v1460
    %2472 = vmatpush1.bf16.msra.mxu0 %v1459
    %2473 = vmatprep.subr.bf16.mxu0 %v1470
    %2474 = vmatpush1.bf16.msra.mxu0 %v1469
    %2475 = vmatprep.subr.bf16.mxu0 %v1480
    %2476 = vmatpush1.bf16.msra.mxu0 %v1479
    %2477 = vmatprep.subr.bf16.mxu0 %v1490
    %2478 = vmatpush1.bf16.msra.mxu0 %v1489
    %2479 = vmatprep.subr.bf16.mxu0 %v1500
    %2480 = vmatpush1.bf16.msra.mxu0 %v1499
    %2481 = vmatprep.subr.bf16.mxu0 %v1510
    %2482 = vmatpush1.bf16.msra.mxu0 %v1509
    %2483 = vmatprep.subr.bf16.mxu0 %v1520
    %2484 = vmatpush1.bf16.msra.mxu0 %v1519
    %2485 = vmatprep.subr.bf16.mxu0 %v1530
    %2486 = vmatpush1.bf16.msra.mxu0 %v1529
    %2487 = vmatprep.subr.bf16.mxu0 %v1540
    %2488 = vmatpush1.bf16.msra.mxu0 %v1539
    %2489 = vmatprep.subr.bf16.mxu0 %v1550
    %2490 = vmatpush1.bf16.msra.mxu0 %v1549
    %2491 = vmatprep.mubr.bf16.mxu0 %v98
    %2492 = vmatmul.mubr.bf16.gmra.mrb[0].mxu0 %v97
    %v2493 = vpop.f32.mrb[0].mxu0
    %v2494 = vadd.f32 0.0, %v2493
    %v2495 = vpop.f32.mrb[0].mxu0
    %v2496 = vadd.f32 0.0, %v2495
    %v2497 = vpop.f32.mrb[0].mxu0
    %v2498 = vadd.f32 0.0, %v2497
    %v2499 = vpop.f32.mrb[0].mxu0
    %v2500 = vadd.f32 0.0, %v2499
    %2501 = vmatprep.mubr.bf16.mxu0 %v102
    %2502 = vmatmul.mubr.bf16.gmra.mrb[0].mxu0 %v101
    %v2503 = vpop.f32.mrb[0].mxu0
    %v2504 = vadd.f32 0.0, %v2503
    %v2505 = vpop.f32.mrb[0].mxu0
    %v2506 = vadd.f32 0.0, %v2505
    %v2507 = vpop.f32.mrb[0].mxu0
    %v2508 = vadd.f32 0.0, %v2507
    %v2509 = vpop.f32.mrb[0].mxu0
    %v2510 = vadd.f32 0.0, %v2509
    %2511 = vmatprep.mubr.bf16.mxu0 %v106
    %2512 = vmatmul.mubr.bf16.gmra.mrb[0].mxu0 %v105
    %v2513 = vpop.f32.mrb[0].mxu0
    %v2514 = vadd.f32 0.0, %v2513
    %v2515 = vpop.f32.mrb[0].mxu0
    %v2516 = vadd.f32 0.0, %v2515
    %v2517 = vpop.f32.mrb[0].mxu0
    %v2518 = vadd.f32 0.0, %v2517
    %v2519 = vpop.f32.mrb[0].mxu0
    %v2520 = vadd.f32 0.0, %v2519
    %2521 = vmatprep.mubr.bf16.mxu0 %v110
    %2522 = vmatmul.mubr.bf16.gmra.mrb[0].mxu0 %v109
    %v2523 = vpop.f32.mrb[0].mxu0
    %v2524 = vadd.f32 0.0, %v2523
    %v2525 = vpop.f32.mrb[0].mxu0
    %v2526 = vadd.f32 0.0, %v2525
    %v2527 = vpop.f32.mrb[0].mxu0
    %v2528 = vpop.f32.mrb[0].mxu0
    %2529 = vdwg.mxu0
    %2530 = vmatprep.subr.bf16.mxu0 %v1560
    %2531 = vmatpush1.bf16.msra.mxu0 %v1559
    %2532 = vmatprep.subr.bf16.mxu0 %v1570
    %2533 = vmatpush1.bf16.msra.mxu0 %v1569
    %2534 = vmatprep.subr.bf16.mxu0 %v1580
    %2535 = vmatpush1.bf16.msra.mxu0 %v1579
    %2536 = vmatprep.subr.bf16.mxu0 %v1590
    %2537 = vmatpush1.bf16.msra.mxu0 %v1589
    %2538 = vmatprep.subr.bf16.mxu0 %v1600
    %2539 = vmatpush1.bf16.msra.mxu0 %v1599
    %2540 = vmatprep.subr.bf16.mxu0 %v1610
    %2541 = vmatpush1.bf16.msra.mxu0 %v1609
    %2542 = vmatprep.subr.bf16.mxu0 %v1620
    %2543 = vmatpush1.bf16.msra.mxu0 %v1619
    %2544 = vmatprep.subr.bf16.mxu0 %v1630
    %2545 = vmatpush1.bf16.msra.mxu0 %v1629
    %2546 = vmatprep.subr.bf16.mxu0 %v1640
    %2547 = vmatpush1.bf16.msra.mxu0 %v1639
    %2548 = vmatprep.subr.bf16.mxu0 %v1650
    %2549 = vmatpush1.bf16.msra.mxu0 %v1649
    %2550 = vmatprep.subr.bf16.mxu0 %v1660
    %2551 = vmatpush1.bf16.msra.mxu0 %v1659
    %2552 = vmatprep.subr.bf16.mxu0 %v1670
    %2553 = vmatpush1.bf16.msra.mxu0 %v1669
    %2554 = vmatprep.subr.bf16.mxu0 %v1680
    %2555 = vmatpush1.bf16.msra.mxu0 %v1679
    %2556 = vmatprep.subr.bf16.mxu0 %v1690
    %2557 = vmatpush1.bf16.msra.mxu0 %v1689
    %2558 = vmatprep.subr.bf16.mxu0 %v1700
    %2559 = vmatpush1.bf16.msra.mxu0 %v1699
    %2560 = vmatprep.subr.bf16.mxu0 %v1710
    %2561 = vmatpush1.bf16.msra.mxu0 %v1709
    %2562 = vmatprep.mubr.bf16.mxu0 %v100
    %2563 = vmatmul.mubr.bf16.gmra.mrb[0].mxu0 %v99
    %v2564 = vpop.f32.mrb[0].mxu0
    %v2565 = vadd.f32 %v2494, %v2564
    %v2566 = vpop.f32.mrb[0].mxu0
    %v2567 = vadd.f32 %v2496, %v2566
    %v2568 = vpop.f32.mrb[0].mxu0
    %v2569 = vadd.f32 %v2498, %v2568
    %v2570 = vpop.f32.mrb[0].mxu0
    %v2571 = vadd.f32 %v2500, %v2570
    %2572 = vmatprep.mubr.bf16.mxu0 %v104
    %2573 = vmatmul.mubr.bf16.gmra.mrb[0].mxu0 %v103
    %v2574 = vpop.f32.mrb[0].mxu0
    %v2575 = vadd.f32 %v2504, %v2574
    %v2576 = vpop.f32.mrb[0].mxu0
    %v2577 = vadd.f32 %v2506, %v2576
    %v2578 = vpop.f32.mrb[0].mxu0
    %v2579 = vadd.f32 %v2508, %v2578
    %v2580 = vpop.f32.mrb[0].mxu0
    %v2581 = vadd.f32 %v2510, %v2580
    %2582 = vmatprep.mubr.bf16.mxu0 %v108
    %2583 = vmatmul.mubr.bf16.gmra.mrb[0].mxu0 %v107
    %v2584 = vpop.f32.mrb[0].mxu0
    %v2585 = vadd.f32 %v2514, %v2584
    %v2586 = vpop.f32.mrb[0].mxu0
    %v2587 = vadd.f32 %v2516, %v2586
    %v2588 = vpop.f32.mrb[0].mxu0
    %v2589 = vadd.f32 %v2518, %v2588
    %v2590 = vpop.f32.mrb[0].mxu0
    %v2591 = vadd.f32 %v2520, %v2590
    %2592 = vmatprep.mubr.bf16.mxu0 %v112
    %2593 = vmatmul.mubr.bf16.gmra.mrb[0].mxu0 %v111
    %v2594 = vpop.f32.mrb[0].mxu0
    %v2595 = vadd.f32 %v2524, %v2594
    %v2596 = vpop.f32.mrb[0].mxu0
    %v2597 = vadd.f32 %v2526, %v2596
    %v2598 = vpop.f32.mrb[0].mxu0
    %v2599 = vpop.f32.mrb[0].mxu0
    %2600 = vdwg.mxu0
    %2601 = vmatprep.subr.bf16.mxu0 %v1402
    %2602 = vmatpush1.bf16.msra.mxu0 %v1401
    %2603 = vmatprep.subr.bf16.mxu0 %v1412
    %2604 = vmatpush1.bf16.msra.mxu0 %v1411
    %2605 = vmatprep.subr.bf16.mxu0 %v1422
    %2606 = vmatpush1.bf16.msra.mxu0 %v1421
    %2607 = vmatprep.subr.bf16.mxu0 %v1432
    %2608 = vmatpush1.bf16.msra.mxu0 %v1431
    %2609 = vmatprep.subr.bf16.mxu0 %v1442
    %2610 = vmatpush1.bf16.msra.mxu0 %v1441
    %2611 = vmatprep.subr.bf16.mxu0 %v1452
    %2612 = vmatpush1.bf16.msra.mxu0 %v1451
    %2613 = vmatprep.subr.bf16.mxu0 %v1462
    %2614 = vmatpush1.bf16.msra.mxu0 %v1461
    %2615 = vmatprep.subr.bf16.mxu0 %v1472
    %2616 = vmatpush1.bf16.msra.mxu0 %v1471
    %2617 = vmatprep.subr.bf16.mxu0 %v1482
    %2618 = vmatpush1.bf16.msra.mxu0 %v1481
    %2619 = vmatprep.subr.bf16.mxu0 %v1492
    %2620 = vmatpush1.bf16.msra.mxu0 %v1491
    %2621 = vmatprep.subr.bf16.mxu0 %v1502
    %2622 = vmatpush1.bf16.msra.mxu0 %v1501
    %2623 = vmatprep.subr.bf16.mxu0 %v1512
    %2624 = vmatpush1.bf16.msra.mxu0 %v1511
    %2625 = vmatprep.subr.bf16.mxu0 %v1522
    %2626 = vmatpush1.bf16.msra.mxu0 %v1521
    %2627 = vmatprep.subr.bf16.mxu0 %v1532
    %2628 = vmatpush1.bf16.msra.mxu0 %v1531
    %2629 = vmatprep.subr.bf16.mxu0 %v1542
    %2630 = vmatpush1.bf16.msra.mxu0 %v1541
    %2631 = vmatprep.subr.bf16.mxu0 %v1552
    %2632 = vmatpush1.bf16.msra.mxu0 %v1551
    %2633 = vmatprep.mubr.bf16.mxu0 %v98
    %2634 = vmatmul.mubr.bf16.gmra.mrb[0].mxu0 %v97
    %v2635 = vpop.f32.mrb[0].mxu0
    %v2636 = vadd.f32 0.0, %v2635
    %v2637 = vpop.f32.mrb[0].mxu0
    %v2638 = vadd.f32 0.0, %v2637
    %v2639 = vpop.f32.mrb[0].mxu0
    %v2640 = vadd.f32 0.0, %v2639
    %v2641 = vpop.f32.mrb[0].mxu0
    %v2642 = vadd.f32 0.0, %v2641
    %2643 = vmatprep.mubr.bf16.mxu0 %v102
    %2644 = vmatmul.mubr.bf16.gmra.mrb[0].mxu0 %v101
    %v2645 = vpop.f32.mrb[0].mxu0
    %v2646 = vadd.f32 0.0, %v2645
    %v2647 = vpop.f32.mrb[0].mxu0
    %v2648 = vadd.f32 0.0, %v2647
    %v2649 = vpop.f32.mrb[0].mxu0
    %v2650 = vadd.f32 0.0, %v2649
    %v2651 = vpop.f32.mrb[0].mxu0
    %v2652 = vadd.f32 0.0, %v2651
    %2653 = vmatprep.mubr.bf16.mxu0 %v106
    %2654 = vmatmul.mubr.bf16.gmra.mrb[0].mxu0 %v105
    %v2655 = vpop.f32.mrb[0].mxu0
    %v2656 = vadd.f32 0.0, %v2655
    %v2657 = vpop.f32.mrb[0].mxu0
    %v2658 = vadd.f32 0.0, %v2657
    %v2659 = vpop.f32.mrb[0].mxu0
    %v2660 = vadd.f32 0.0, %v2659
    %v2661 = vpop.f32.mrb[0].mxu0
    %v2662 = vadd.f32 0.0, %v2661
    %2663 = vmatprep.mubr.bf16.mxu0 %v110
    %2664 = vmatmul.mubr.bf16.gmra.mrb[0].mxu0 %v109
    %v2665 = vpop.f32.mrb[0].mxu0
    %v2666 = vadd.f32 0.0, %v2665
    %v2667 = vpop.f32.mrb[0].mxu0
    %v2668 = vadd.f32 0.0, %v2667
    %v2669 = vpop.f32.mrb[0].mxu0
    %v2670 = vpop.f32.mrb[0].mxu0
    %2671 = vdwg.mxu0
    %2672 = vmatprep.subr.bf16.mxu0 %v1562
    %2673 = vmatpush1.bf16.msra.mxu0 %v1561
    %2674 = vmatprep.subr.bf16.mxu0 %v1572
    %2675 = vmatpush1.bf16.msra.mxu0 %v1571
    %2676 = vmatprep.subr.bf16.mxu0 %v1582
    %2677 = vmatpush1.bf16.msra.mxu0 %v1581
    %2678 = vmatprep.subr.bf16.mxu0 %v1592
    %2679 = vmatpush1.bf16.msra.mxu0 %v1591
    %2680 = vmatprep.subr.bf16.mxu0 %v1602
    %2681 = vmatpush1.bf16.msra.mxu0 %v1601
    %2682 = vmatprep.subr.bf16.mxu0 %v1612
    %2683 = vmatpush1.bf16.msra.mxu0 %v1611
    %2684 = vmatprep.subr.bf16.mxu0 %v1622
    %2685 = vmatpush1.bf16.msra.mxu0 %v1621
    %2686 = vmatprep.subr.bf16.mxu0 %v1632
    %2687 = vmatpush1.bf16.msra.mxu0 %v1631
    %2688 = vmatprep.subr.bf16.mxu0 %v1642
    %2689 = vmatpush1.bf16.msra.mxu0 %v1641
    %2690 = vmatprep.subr.bf16.mxu0 %v1652
    %2691 = vmatpush1.bf16.msra.mxu0 %v1651
    %2692 = vmatprep.subr.bf16.mxu0 %v1662
    %2693 = vmatpush1.bf16.msra.mxu0 %v1661
    %2694 = vmatprep.subr.bf16.mxu0 %v1672
    %2695 = vmatpush1.bf16.msra.mxu0 %v1671
    %2696 = vmatprep.subr.bf16.mxu0 %v1682
    %2697 = vmatpush1.bf16.msra.mxu0 %v1681
    %2698 = vmatprep.subr.bf16.mxu0 %v1692
    %2699 = vmatpush1.bf16.msra.mxu0 %v1691
    %2700 = vmatprep.subr.bf16.mxu0 %v1702
    %2701 = vmatpush1.bf16.msra.mxu0 %v1701
    %2702 = vmatprep.subr.bf16.mxu0 %v1712
    %2703 = vmatpush1.bf16.msra.mxu0 %v1711
    %2704 = vmatprep.mubr.bf16.mxu0 %v100
    %2705 = vmatmul.mubr.bf16.gmra.mrb[0].mxu0 %v99
    %v2706 = vpop.f32.mrb[0].mxu0
    %v2707 = vadd.f32 %v2636, %v2706
    %v2708 = vpop.f32.mrb[0].mxu0
    %v2709 = vadd.f32 %v2638, %v2708
    %v2710 = vpop.f32.mrb[0].mxu0
    %v2711 = vadd.f32 %v2640, %v2710
    %v2712 = vpop.f32.mrb[0].mxu0
    %v2713 = vadd.f32 %v2642, %v2712
    %2714 = vmatprep.mubr.bf16.mxu0 %v104
    %2715 = vmatmul.mubr.bf16.gmra.mrb[0].mxu0 %v103
    %v2716 = vpop.f32.mrb[0].mxu0
    %v2717 = vadd.f32 %v2646, %v2716
    %v2718 = vpop.f32.mrb[0].mxu0
    %v2719 = vadd.f32 %v2648, %v2718
    %v2720 = vpop.f32.mrb[0].mxu0
    %v2721 = vadd.f32 %v2650, %v2720
    %v2722 = vpop.f32.mrb[0].mxu0
    %v2723 = vadd.f32 %v2652, %v2722
    %2724 = vmatprep.mubr.bf16.mxu0 %v108
    %2725 = vmatmul.mubr.bf16.gmra.mrb[0].mxu0 %v107
    %v2726 = vpop.f32.mrb[0].mxu0
    %v2727 = vadd.f32 %v2656, %v2726
    %v2728 = vpop.f32.mrb[0].mxu0
    %v2729 = vadd.f32 %v2658, %v2728
    %v2730 = vpop.f32.mrb[0].mxu0
    %v2731 = vadd.f32 %v2660, %v2730
    %v2732 = vpop.f32.mrb[0].mxu0
    %v2733 = vadd.f32 %v2662, %v2732
    %2734 = vmatprep.mubr.bf16.mxu0 %v112
    %2735 = vmatmul.mubr.bf16.gmra.mrb[0].mxu0 %v111
    %v2736 = vpop.f32.mrb[0].mxu0
    %v2737 = vadd.f32 %v2666, %v2736
    %v2738 = vpop.f32.mrb[0].mxu0
    %v2739 = vadd.f32 %v2668, %v2738
    %v2740 = vpop.f32.mrb[0].mxu0
    %v2741 = vpop.f32.mrb[0].mxu0
    %2742 = vdwg.mxu0
    %v2743 = vadd.f32 %v2139, %v2143
    %v2744 = vadd.f32 %v2743, %v2149
    %v2745 = vadd.f32 %v2744, %v2153
    %v2746 = vadd.f32 %v2745, %v2159
    %v2747 = vadd.f32 %v2746, %v2163
    %vm2748 = vcmask 1040384
    %v2749 = vsel %vm2748, %v2169, 0.0
    %v2750 = vadd.f32 %v2747, %v2749
    %v2751 = vrot.slane %v2750, 4
    %v2752 = vadd.f32 %v2750, %v2751
    %v2753 = vrot.slane %v2752, 2
    %v2754 = vadd.f32 %v2752, %v2753
    %v2755 = vrot.slane %v2754, 1
    %v2756 = vadd.f32 %v2754, %v2755
    %v2757 = vadd.f32 %v2141, %v2145
    %v2758 = vadd.f32 %v2757, %v2151
    %v2759 = vadd.f32 %v2758, %v2155
    %v2760 = vadd.f32 %v2759, %v2161
    %v2761 = vadd.f32 %v2760, %v2165
    %v2762 = vsel %vm2748, %v2171, 0.0
    %v2763 = vadd.f32 %v2761, %v2762
    %v2764 = vrot.slane %v2763, 4
    %v2765 = vadd.f32 %v2763, %v2764
    %v2766 = vrot.slane %v2765, 2
    %v2767 = vadd.f32 %v2765, %v2766
    %v2768 = vrot.slane %v2767, 1
    %v2769 = vadd.f32 %v2767, %v2768
    %v2770 = vadd.f32 %v2281, %v2285
    %v2771 = vadd.f32 %v2770, %v2291
    %v2772 = vadd.f32 %v2771, %v2295
    %v2773 = vadd.f32 %v2772, %v2301
    %v2774 = vadd.f32 %v2773, %v2305
    %v2775 = vsel %vm2748, %v2311, 0.0
    %v2776 = vadd.f32 %v2774, %v2775
    %v2777 = vrot.slane %v2776, 4
    %v2778 = vadd.f32 %v2776, %v2777
    %v2779 = vrot.slane %v2778, 2
    %v2780 = vadd.f32 %v2778, %v2779
    %v2781 = vrot.slane %v2780, 1
    %v2782 = vadd.f32 %v2780, %v2781
    %v2783 = vadd.f32 %v2283, %v2287
    %v2784 = vadd.f32 %v2783, %v2293
    %v2785 = vadd.f32 %v2784, %v2297
    %v2786 = vadd.f32 %v2785, %v2303
    %v2787 = vadd.f32 %v2786, %v2307
    %v2788 = vsel %vm2748, %v2313, 0.0
    %v2789 = vadd.f32 %v2787, %v2788
    %v2790 = vrot.slane %v2789, 4
    %v2791 = vadd.f32 %v2789, %v2790
    %v2792 = vrot.slane %v2791, 2
    %v2793 = vadd.f32 %v2791, %v2792
    %v2794 = vrot.slane %v2793, 1
    %v2795 = vadd.f32 %v2793, %v2794
    %v2796 = vadd.f32 %v2423, %v2427
    %v2797 = vadd.f32 %v2796, %v2433
    %v2798 = vadd.f32 %v2797, %v2437
    %v2799 = vadd.f32 %v2798, %v2443
    %v2800 = vadd.f32 %v2799, %v2447
    %v2801 = vsel %vm2748, %v2453, 0.0
    %v2802 = vadd.f32 %v2800, %v2801
    %v2803 = vrot.slane %v2802, 4
    %v2804 = vadd.f32 %v2802, %v2803
    %v2805 = vrot.slane %v2804, 2
    %v2806 = vadd.f32 %v2804, %v2805
    %v2807 = vrot.slane %v2806, 1
    %v2808 = vadd.f32 %v2806, %v2807
    %v2809 = vadd.f32 %v2425, %v2429
    %v2810 = vadd.f32 %v2809, %v2435
    %v2811 = vadd.f32 %v2810, %v2439
    %v2812 = vadd.f32 %v2811, %v2445
    %v2813 = vadd.f32 %v2812, %v2449
    %v2814 = vsel %vm2748, %v2455, 0.0
    %v2815 = vadd.f32 %v2813, %v2814
    %v2816 = vrot.slane %v2815, 4
    %v2817 = vadd.f32 %v2815, %v2816
    %v2818 = vrot.slane %v2817, 2
    %v2819 = vadd.f32 %v2817, %v2818
    %v2820 = vrot.slane %v2819, 1
    %v2821 = vadd.f32 %v2819, %v2820
    %v2822 = vadd.f32 %v2565, %v2569
    %v2823 = vadd.f32 %v2822, %v2575
    %v2824 = vadd.f32 %v2823, %v2579
    %v2825 = vadd.f32 %v2824, %v2585
    %v2826 = vadd.f32 %v2825, %v2589
    %v2827 = vsel %vm2748, %v2595, 0.0
    %v2828 = vadd.f32 %v2826, %v2827
    %v2829 = vrot.slane %v2828, 4
    %v2830 = vadd.f32 %v2828, %v2829
    %v2831 = vrot.slane %v2830, 2
    %v2832 = vadd.f32 %v2830, %v2831
    %v2833 = vrot.slane %v2832, 1
    %v2834 = vadd.f32 %v2832, %v2833
    %v2835 = vadd.f32 %v2567, %v2571
    %v2836 = vadd.f32 %v2835, %v2577
    %v2837 = vadd.f32 %v2836, %v2581
    %v2838 = vadd.f32 %v2837, %v2587
    %v2839 = vadd.f32 %v2838, %v2591
    %v2840 = vsel %vm2748, %v2597, 0.0
    %v2841 = vadd.f32 %v2839, %v2840
    %v2842 = vrot.slane %v2841, 4
    %v2843 = vadd.f32 %v2841, %v2842
    %v2844 = vrot.slane %v2843, 2
    %v2845 = vadd.f32 %v2843, %v2844
    %v2846 = vrot.slane %v2845, 1
    %v2847 = vadd.f32 %v2845, %v2846
    %v2848 = vadd.f32 %v2707, %v2711
    %v2849 = vadd.f32 %v2848, %v2717
    %v2850 = vadd.f32 %v2849, %v2721
    %v2851 = vadd.f32 %v2850, %v2727
    %v2852 = vadd.f32 %v2851, %v2731
    %v2853 = vsel %vm2748, %v2737, 0.0
    %v2854 = vadd.f32 %v2852, %v2853
    %v2855 = vrot.slane %v2854, 4
    %v2856 = vadd.f32 %v2854, %v2855
    %v2857 = vrot.slane %v2856, 2
    %v2858 = vadd.f32 %v2856, %v2857
    %v2859 = vrot.slane %v2858, 1
    %v2860 = vadd.f32 %v2858, %v2859
    %v2861 = vadd.f32 %v2709, %v2713
    %v2862 = vadd.f32 %v2861, %v2719
    %v2863 = vadd.f32 %v2862, %v2723
    %v2864 = vadd.f32 %v2863, %v2729
    %v2865 = vadd.f32 %v2864, %v2733
    %v2866 = vsel %vm2748, %v2739, 0.0
    %v2867 = vadd.f32 %v2865, %v2866
    %v2868 = vrot.slane %v2867, 4
    %v2869 = vadd.f32 %v2867, %v2868
    %v2870 = vrot.slane %v2869, 2
    %v2871 = vadd.f32 %v2869, %v2870
    %v2872 = vrot.slane %v2871, 1
    %v2873 = vadd.f32 %v2871, %v2872
    %v2874 = vmul.f32 %v2139, %v2139
    %v2875 = vmul.f32 %v2141, %v2141
    %v2876 = vmul.f32 %v2281, %v2281
    %v2877 = vmul.f32 %v2283, %v2283
    %v2878 = vmul.f32 %v2423, %v2423
    %v2879 = vmul.f32 %v2425, %v2425
    %v2880 = vmul.f32 %v2565, %v2565
    %v2881 = vmul.f32 %v2567, %v2567
    %v2882 = vmul.f32 %v2707, %v2707
    %v2883 = vmul.f32 %v2709, %v2709
    %v2884 = vmul.f32 %v2143, %v2143
    %v2885 = vmul.f32 %v2145, %v2145
    %v2886 = vmul.f32 %v2285, %v2285
    %v2887 = vmul.f32 %v2287, %v2287
    %v2888 = vmul.f32 %v2427, %v2427
    %v2889 = vmul.f32 %v2429, %v2429
    %v2890 = vmul.f32 %v2569, %v2569
    %v2891 = vmul.f32 %v2571, %v2571
    %v2892 = vmul.f32 %v2711, %v2711
    %v2893 = vmul.f32 %v2713, %v2713
    %v2894 = vmul.f32 %v2149, %v2149
    %v2895 = vmul.f32 %v2151, %v2151
    %v2896 = vmul.f32 %v2291, %v2291
    %v2897 = vmul.f32 %v2293, %v2293
    %v2898 = vmul.f32 %v2433, %v2433
    %v2899 = vmul.f32 %v2435, %v2435
    %v2900 = vmul.f32 %v2575, %v2575
    %v2901 = vmul.f32 %v2577, %v2577
    %v2902 = vmul.f32 %v2717, %v2717
    %v2903 = vmul.f32 %v2719, %v2719
    %v2904 = vmul.f32 %v2153, %v2153
    %v2905 = vmul.f32 %v2155, %v2155
    %v2906 = vmul.f32 %v2295, %v2295
    %v2907 = vmul.f32 %v2297, %v2297
    %v2908 = vmul.f32 %v2437, %v2437
    %v2909 = vmul.f32 %v2439, %v2439
    %v2910 = vmul.f32 %v2579, %v2579
    %v2911 = vmul.f32 %v2581, %v2581
    %v2912 = vmul.f32 %v2721, %v2721
    %v2913 = vmul.f32 %v2723, %v2723
    %v2914 = vmul.f32 %v2159, %v2159
    %v2915 = vmul.f32 %v2161, %v2161
    %v2916 = vmul.f32 %v2301, %v2301
    %v2917 = vmul.f32 %v2303, %v2303
    %v2918 = vmul.f32 %v2443, %v2443
    %v2919 = vmul.f32 %v2445, %v2445
    %v2920 = vmul.f32 %v2585, %v2585
    %v2921 = vmul.f32 %v2587, %v2587
    %v2922 = vmul.f32 %v2727, %v2727
    %v2923 = vmul.f32 %v2729, %v2729
    %v2924 = vmul.f32 %v2163, %v2163
    %v2925 = vmul.f32 %v2165, %v2165
    %v2926 = vmul.f32 %v2305, %v2305
    %v2927 = vmul.f32 %v2307, %v2307
    %v2928 = vmul.f32 %v2447, %v2447
    %v2929 = vmul.f32 %v2449, %v2449
    %v2930 = vmul.f32 %v2589, %v2589
    %v2931 = vmul.f32 %v2591, %v2591
    %v2932 = vmul.f32 %v2731, %v2731
    %v2933 = vmul.f32 %v2733, %v2733
    %v2934 = vmul.f32 %v2169, %v2169
    %v2935 = vmul.f32 %v2171, %v2171
    %v2936 = vmul.f32 %v2311, %v2311
    %v2937 = vmul.f32 %v2313, %v2313
    %v2938 = vmul.f32 %v2453, %v2453
    %v2939 = vmul.f32 %v2455, %v2455
    %v2940 = vmul.f32 %v2595, %v2595
    %v2941 = vmul.f32 %v2597, %v2597
    %v2942 = vmul.f32 %v2737, %v2737
    %v2943 = vmul.f32 %v2739, %v2739
    %v2944 = vadd.f32 %v2874, %v2884
    %v2945 = vadd.f32 %v2944, %v2894
    %v2946 = vadd.f32 %v2945, %v2904
    %v2947 = vadd.f32 %v2946, %v2914
    %v2948 = vadd.f32 %v2947, %v2924
    %v2949 = vsel %vm2748, %v2934, 0.0
    %v2950 = vadd.f32 %v2948, %v2949
    %v2951 = vrot.slane %v2950, 4
    %v2952 = vadd.f32 %v2950, %v2951
    %v2953 = vrot.slane %v2952, 2
    %v2954 = vadd.f32 %v2952, %v2953
    %v2955 = vrot.slane %v2954, 1
    %v2956 = vadd.f32 %v2954, %v2955
    %v2957 = vadd.f32 %v2875, %v2885
    %v2958 = vadd.f32 %v2957, %v2895
    %v2959 = vadd.f32 %v2958, %v2905
    %v2960 = vadd.f32 %v2959, %v2915
    %v2961 = vadd.f32 %v2960, %v2925
    %v2962 = vsel %vm2748, %v2935, 0.0
    %v2963 = vadd.f32 %v2961, %v2962
    %v2964 = vrot.slane %v2963, 4
    %v2965 = vadd.f32 %v2963, %v2964
    %v2966 = vrot.slane %v2965, 2
    %v2967 = vadd.f32 %v2965, %v2966
    %v2968 = vrot.slane %v2967, 1
    %v2969 = vadd.f32 %v2967, %v2968
    %v2970 = vadd.f32 %v2876, %v2886
    %v2971 = vadd.f32 %v2970, %v2896
    %v2972 = vadd.f32 %v2971, %v2906
    %v2973 = vadd.f32 %v2972, %v2916
    %v2974 = vadd.f32 %v2973, %v2926
    %v2975 = vsel %vm2748, %v2936, 0.0
    %v2976 = vadd.f32 %v2974, %v2975
    %v2977 = vrot.slane %v2976, 4
    %v2978 = vadd.f32 %v2976, %v2977
    %v2979 = vrot.slane %v2978, 2
    %v2980 = vadd.f32 %v2978, %v2979
    %v2981 = vrot.slane %v2980, 1
    %v2982 = vadd.f32 %v2980, %v2981
    %v2983 = vadd.f32 %v2877, %v2887
    %v2984 = vadd.f32 %v2983, %v2897
    %v2985 = vadd.f32 %v2984, %v2907
    %v2986 = vadd.f32 %v2985, %v2917
    %v2987 = vadd.f32 %v2986, %v2927
    %v2988 = vsel %vm2748, %v2937, 0.0
    %v2989 = vadd.f32 %v2987, %v2988
    %v2990 = vrot.slane %v2989, 4
    %v2991 = vadd.f32 %v2989, %v2990
    %v2992 = vrot.slane %v2991, 2
    %v2993 = vadd.f32 %v2991, %v2992
    %v2994 = vrot.slane %v2993, 1
    %v2995 = vadd.f32 %v2993, %v2994
    %v2996 = vadd.f32 %v2878, %v2888
    %v2997 = vadd.f32 %v2996, %v2898
    %v2998 = vadd.f32 %v2997, %v2908
    %v2999 = vadd.f32 %v2998, %v2918
    %v3000 = vadd.f32 %v2999, %v2928
    %v3001 = vsel %vm2748, %v2938, 0.0
    %v3002 = vadd.f32 %v3000, %v3001
    %v3003 = vrot.slane %v3002, 4
    %v3004 = vadd.f32 %v3002, %v3003
    %v3005 = vrot.slane %v3004, 2
    %v3006 = vadd.f32 %v3004, %v3005
    %v3007 = vrot.slane %v3006, 1
    %v3008 = vadd.f32 %v3006, %v3007
    %v3009 = vadd.f32 %v2879, %v2889
    %v3010 = vadd.f32 %v3009, %v2899
    %v3011 = vadd.f32 %v3010, %v2909
    %v3012 = vadd.f32 %v3011, %v2919
    %v3013 = vadd.f32 %v3012, %v2929
    %v3014 = vsel %vm2748, %v2939, 0.0
    %v3015 = vadd.f32 %v3013, %v3014
    %v3016 = vrot.slane %v3015, 4
    %v3017 = vadd.f32 %v3015, %v3016
    %v3018 = vrot.slane %v3017, 2
    %v3019 = vadd.f32 %v3017, %v3018
    %v3020 = vrot.slane %v3019, 1
    %v3021 = vadd.f32 %v3019, %v3020
    %v3022 = vadd.f32 %v2880, %v2890
    %v3023 = vadd.f32 %v3022, %v2900
    %v3024 = vadd.f32 %v3023, %v2910
    %v3025 = vadd.f32 %v3024, %v2920
    %v3026 = vadd.f32 %v3025, %v2930
    %v3027 = vsel %vm2748, %v2940, 0.0
    %v3028 = vadd.f32 %v3026, %v3027
    %v3029 = vrot.slane %v3028, 4
    %v3030 = vadd.f32 %v3028, %v3029
    %v3031 = vrot.slane %v3030, 2
    %v3032 = vadd.f32 %v3030, %v3031
    %v3033 = vrot.slane %v3032, 1
    %v3034 = vadd.f32 %v3032, %v3033
    %v3035 = vadd.f32 %v2881, %v2891
    %v3036 = vadd.f32 %v3035, %v2901
    %v3037 = vadd.f32 %v3036, %v2911
    %v3038 = vadd.f32 %v3037, %v2921
    %v3039 = vadd.f32 %v3038, %v2931
    %v3040 = vsel %vm2748, %v2941, 0.0
    %v3041 = vadd.f32 %v3039, %v3040
    %v3042 = vrot.slane %v3041, 4
    %v3043 = vadd.f32 %v3041, %v3042
    %v3044 = vrot.slane %v3043, 2
    %v3045 = vadd.f32 %v3043, %v3044
    %v3046 = vrot.slane %v3045, 1
    %v3047 = vadd.f32 %v3045, %v3046
    %v3048 = vadd.f32 %v2882, %v2892
    %v3049 = vadd.f32 %v3048, %v2902
    %v3050 = vadd.f32 %v3049, %v2912
    %v3051 = vadd.f32 %v3050, %v2922
    %v3052 = vadd.f32 %v3051, %v2932
    %v3053 = vsel %vm2748, %v2942, 0.0
    %v3054 = vadd.f32 %v3052, %v3053
    %v3055 = vrot.slane %v3054, 4
    %v3056 = vadd.f32 %v3054, %v3055
    %v3057 = vrot.slane %v3056, 2
    %v3058 = vadd.f32 %v3056, %v3057
    %v3059 = vrot.slane %v3058, 1
    %v3060 = vadd.f32 %v3058, %v3059
    %v3061 = vadd.f32 %v2883, %v2893
    %v3062 = vadd.f32 %v3061, %v2903
    %v3063 = vadd.f32 %v3062, %v2913
    %v3064 = vadd.f32 %v3063, %v2923
    %v3065 = vadd.f32 %v3064, %v2933
    %v3066 = vsel %vm2748, %v2943, 0.0
    %v3067 = vadd.f32 %v3065, %v3066
    %v3068 = vrot.slane %v3067, 4
    %v3069 = vadd.f32 %v3067, %v3068
    %v3070 = vrot.slane %v3069, 2
    %v3071 = vadd.f32 %v3069, %v3070
    %v3072 = vrot.slane %v3071, 1
    %v3073 = vadd.f32 %v3071, %v3072
    %v3074 = vmul.f32 %v2756, 0.020408163
    %v3075 = vmul.f32 %v2769, 0.020408163
    %v3076 = vmul.f32 %v2782, 0.020408163
    %v3077 = vmul.f32 %v2795, 0.020408163
    %v3078 = vmul.f32 %v2808, 0.020408163
    %v3079 = vmul.f32 %v2821, 0.020408163
    %v3080 = vmul.f32 %v2834, 0.020408163
    %v3081 = vmul.f32 %v2847, 0.020408163
    %v3082 = vmul.f32 %v2860, 0.020408163
    %v3083 = vmul.f32 %v2873, 0.020408163
    %v3084 = vmul.f32 %v2956, 0.020408163
    %v3085 = vmul.f32 %v2969, 0.020408163
    %v3086 = vmul.f32 %v2982, 0.020408163
    %v3087 = vmul.f32 %v2995, 0.020408163
    %v3088 = vmul.f32 %v3008, 0.020408163
    %v3089 = vmul.f32 %v3021, 0.020408163
    %v3090 = vmul.f32 %v3034, 0.020408163
    %v3091 = vmul.f32 %v3047, 0.020408163
    %v3092 = vmul.f32 %v3060, 0.020408163
    %v3093 = vmul.f32 %v3073, 0.020408163
    %v3094 = vmul.f32 %v3074, %v3074
    %v3095 = vmul.f32 %v3075, %v3075
    %v3096 = vmul.f32 %v3076, %v3076
    %v3097 = vmul.f32 %v3077, %v3077
    %v3098 = vmul.f32 %v3078, %v3078
    %v3099 = vmul.f32 %v3079, %v3079
    %v3100 = vmul.f32 %v3080, %v3080
    %v3101 = vmul.f32 %v3081, %v3081
    %v3102 = vmul.f32 %v3082, %v3082
    %v3103 = vmul.f32 %v3083, %v3083
    %v3104 = vsub.f32 %v3084, %v3094
    %v3105 = vsub.f32 %v3085, %v3095
    %v3106 = vsub.f32 %v3086, %v3096
    %v3107 = vsub.f32 %v3087, %v3097
    %v3108 = vsub.f32 %v3088, %v3098
    %v3109 = vsub.f32 %v3089, %v3099
    %v3110 = vsub.f32 %v3090, %v3100
    %v3111 = vsub.f32 %v3091, %v3101
    %v3112 = vsub.f32 %v3092, %v3102
    %v3113 = vsub.f32 %v3093, %v3103
    %v3114 = vmax.f32 %v3104, 0.0
    %v3115 = vmax.f32 %v3105, 0.0
    %v3116 = vmax.f32 %v3106, 0.0
    %v3117 = vmax.f32 %v3107, 0.0
    %v3118 = vmax.f32 %v3108, 0.0
    %v3119 = vmax.f32 %v3109, 0.0
    %v3120 = vmax.f32 %v3110, 0.0
    %v3121 = vmax.f32 %v3111, 0.0
    %v3122 = vmax.f32 %v3112, 0.0
    %v3123 = vmax.f32 %v3113, 0.0
    %v3124 = vadd.f32 %v3114, 0.001
    %v3125 = vadd.f32 %v3115, 0.001
    %v3126 = vadd.f32 %v3116, 0.001
    %v3127 = vadd.f32 %v3117, 0.001
    %v3128 = vadd.f32 %v3118, 0.001
    %v3129 = vadd.f32 %v3119, 0.001
    %v3130 = vadd.f32 %v3120, 0.001
    %v3131 = vadd.f32 %v3121, 0.001
    %v3132 = vadd.f32 %v3122, 0.001
    %v3133 = vadd.f32 %v3123, 0.001
    %v3134 = vrsqrt.pop %v3124
    %v3135 = vrsqrt.pop %v3125
    %v3136 = vrsqrt.pop %v3126
    %v3137 = vrsqrt.pop %v3127
    %v3138 = vrsqrt.pop %v3128
    %v3139 = vrsqrt.pop %v3129
    %v3140 = vrsqrt.pop %v3130
    %v3141 = vrsqrt.pop %v3131
    %v3142 = vrsqrt.pop %v3132
    %v3143 = vrsqrt.pop %v3133
    %v3144 = vld [vmem:[#allocation7] sm:$0xff]
    %v3145 = vld [vmem:[#allocation7 + $0x8] sm:$0x3]
    %v3156 = vcombine.low %v3134, %v3135
    %v3157 = vcombine.low %v3136, %v3137
    %v3158 = vcombine.low %v3138, %v3139
    %v3159 = vcombine.low %v3140, %v3141
    %v3161 = vunpack.c.l.s4 1966171168
    %v3162 = vunpack.c.0.s8 %v3161
    %v3163 = vlaneseq
    %v3164 = vshrl.u32 %v3163, 7
    %v3165 = vsub.s32 %v3162, %v3164
    %v3166 = vrot.slane %v3156, %v3165
    %v3168 = vunpack.c.l.s4 1966171168
    %v3169 = vunpack.c.0.s8 %v3168
    %v3170 = vlaneseq
    %v3171 = vshrl.u32 %v3170, 7
    %v3172 = vsub.s32 %v3169, %v3171
    %v3173 = vrot.slane %v3157, %v3172
    %v3175 = vunpack.c.l.s4 1966171168
    %v3176 = vunpack.c.0.s8 %v3175
    %v3177 = vlaneseq
    %v3178 = vshrl.u32 %v3177, 7
    %v3179 = vsub.s32 %v3176, %v3178
    %v3180 = vrot.slane %v3158, %v3179
    %v3182 = vunpack.c.l.s4 1966171168
    %v3183 = vunpack.c.0.s8 %v3182
    %v3184 = vlaneseq
    %v3185 = vshrl.u32 %v3184, 7
    %v3186 = vsub.s32 %v3183, %v3185
    %v3187 = vrot.slane %v3159, %v3186
    %v3188 = vcombine.low %v3166, %v3173
    %v3189 = vcombine.low %v3180, %v3187
    %v3191 = vunpack.c.l.s4 1966171168
    %v3192 = vunpack.c.0.s8 %v3191
    %v3193 = vlaneseq
    %v3194 = vshrl.u32 %v3193, 7
    %v3195 = vsub.s32 %v3192, %v3194
    %v3196 = vrot.slane %v3188, %v3195
    %v3198 = vunpack.c.l.s4 1966171168
    %v3199 = vunpack.c.0.s8 %v3198
    %v3200 = vlaneseq
    %v3201 = vshrl.u32 %v3200, 7
    %v3202 = vsub.s32 %v3199, %v3201
    %v3203 = vrot.slane %v3189, %v3202
    %v3204 = vcombine.low %v3196, %v3203
    %v3205 = vcombine.low %v3142, %v3143
    %v3207 = vunpack.c.l.s4 1966171168
    %v3208 = vunpack.c.0.s8 %v3207
    %v3209 = vlaneseq
    %v3210 = vshrl.u32 %v3209, 7
    %v3211 = vsub.s32 %v3208, %v3210
    %v3212 = vrot.slane %v3205, %v3211
    %v3214 = vunpack.c.l.s4 1966171168
    %v3215 = vunpack.c.0.s8 %v3214
    %v3216 = vlaneseq
    %v3217 = vshrl.u32 %v3216, 7
    %v3218 = vsub.s32 %v3215, %v3217
    %v3219 = vrot.slane %v3212, %v3218
    %v3222 = vmul.f32 %v3144, %v3204
    %v3223 = vmul.f32 %v3145, %v3219
    %v3224 = vld [vmem:[#allocation8] sm:$0xff]
    %v3225 = vld [vmem:[#allocation8 + $0x8] sm:$0x3]
    %v3228 = vlaneseq
    %v3229 = vshrl.u32 %v3228, 7
    %v3230 = vsub.s32 0, %v3229
    %v3231 = vrot.slane %v3222, %v3230
    %v3232 = vlaneseq
    %v3233 = vshrl.u32 %v3232, 7
    %v3234 = vsub.s32 1, %v3233
    %v3235 = vrot.slane %v3222, %v3234
    %v3236 = vlaneseq
    %v3237 = vshrl.u32 %v3236, 7
    %v3238 = vsub.s32 2, %v3237
    %v3239 = vrot.slane %v3222, %v3238
    %v3240 = vlaneseq
    %v3241 = vshrl.u32 %v3240, 7
    %v3242 = vsub.s32 3, %v3241
    %v3243 = vrot.slane %v3222, %v3242
    %v3244 = vlaneseq
    %v3245 = vshrl.u32 %v3244, 7
    %v3246 = vsub.s32 4, %v3245
    %v3247 = vrot.slane %v3222, %v3246
    %v3248 = vlaneseq
    %v3249 = vshrl.u32 %v3248, 7
    %v3250 = vsub.s32 5, %v3249
    %v3251 = vrot.slane %v3222, %v3250
    %v3252 = vlaneseq
    %v3253 = vshrl.u32 %v3252, 7
    %v3254 = vsub.s32 6, %v3253
    %v3255 = vrot.slane %v3222, %v3254
    %v3256 = vlaneseq
    %v3257 = vshrl.u32 %v3256, 7
    %v3258 = vsub.s32 7, %v3257
    %v3259 = vrot.slane %v3222, %v3258
    %v3260 = vlaneseq
    %v3261 = vshrl.u32 %v3260, 7
    %v3262 = vsub.s32 0, %v3261
    %v3263 = vrot.slane %v3223, %v3262
    %v3264 = vlaneseq
    %v3265 = vshrl.u32 %v3264, 7
    %v3266 = vsub.s32 1, %v3265
    %v3267 = vrot.slane %v3223, %v3266
    %v3278 = vmul.f32 %v3074, %v3231
    %v3279 = vmul.f32 %v3075, %v3235
    %v3280 = vmul.f32 %v3076, %v3239
    %v3281 = vmul.f32 %v3077, %v3243
    %v3282 = vmul.f32 %v3078, %v3247
    %v3283 = vmul.f32 %v3079, %v3251
    %v3284 = vmul.f32 %v3080, %v3255
    %v3285 = vmul.f32 %v3081, %v3259
    %v3286 = vmul.f32 %v3082, %v3263
    %v3287 = vmul.f32 %v3083, %v3267
    %v3298 = vcombine.low %v3278, %v3279
    %v3299 = vcombine.low %v3280, %v3281
    %v3300 = vcombine.low %v3282, %v3283
    %v3301 = vcombine.low %v3284, %v3285
    %v3303 = vunpack.c.l.s4 1966171168
    %v3304 = vunpack.c.0.s8 %v3303
    %v3305 = vlaneseq
    %v3306 = vshrl.u32 %v3305, 7
    %v3307 = vsub.s32 %v3304, %v3306
    %v3308 = vrot.slane %v3298, %v3307
    %v3310 = vunpack.c.l.s4 1966171168
    %v3311 = vunpack.c.0.s8 %v3310
    %v3312 = vlaneseq
    %v3313 = vshrl.u32 %v3312, 7
    %v3314 = vsub.s32 %v3311, %v3313
    %v3315 = vrot.slane %v3299, %v3314
    %v3317 = vunpack.c.l.s4 1966171168
    %v3318 = vunpack.c.0.s8 %v3317
    %v3319 = vlaneseq
    %v3320 = vshrl.u32 %v3319, 7
    %v3321 = vsub.s32 %v3318, %v3320
    %v3322 = vrot.slane %v3300, %v3321
    %v3324 = vunpack.c.l.s4 1966171168
    %v3325 = vunpack.c.0.s8 %v3324
    %v3326 = vlaneseq
    %v3327 = vshrl.u32 %v3326, 7
    %v3328 = vsub.s32 %v3325, %v3327
    %v3329 = vrot.slane %v3301, %v3328
    %v3330 = vcombine.low %v3308, %v3315
    %v3331 = vcombine.low %v3322, %v3329
    %v3333 = vunpack.c.l.s4 1966171168
    %v3334 = vunpack.c.0.s8 %v3333
    %v3335 = vlaneseq
    %v3336 = vshrl.u32 %v3335, 7
    %v3337 = vsub.s32 %v3334, %v3336
    %v3338 = vrot.slane %v3330, %v3337
    %v3340 = vunpack.c.l.s4 1966171168
    %v3341 = vunpack.c.0.s8 %v3340
    %v3342 = vlaneseq
    %v3343 = vshrl.u32 %v3342, 7
    %v3344 = vsub.s32 %v3341, %v3343
    %v3345 = vrot.slane %v3331, %v3344
    %v3346 = vcombine.low %v3338, %v3345
    %v3347 = vcombine.low %v3286, %v3287
    %v3349 = vunpack.c.l.s4 1966171168
    %v3350 = vunpack.c.0.s8 %v3349
    %v3351 = vlaneseq
    %v3352 = vshrl.u32 %v3351, 7
    %v3353 = vsub.s32 %v3350, %v3352
    %v3354 = vrot.slane %v3347, %v3353
    %v3356 = vunpack.c.l.s4 1966171168
    %v3357 = vunpack.c.0.s8 %v3356
    %v3358 = vlaneseq
    %v3359 = vshrl.u32 %v3358, 7
    %v3360 = vsub.s32 %v3357, %v3359
    %v3361 = vrot.slane %v3354, %v3360
    %v3364 = vsub.f32 %v3224, %v3346
    %v3365 = vsub.f32 %v3225, %v3361
    %v3366 = vmul.f32 %v2139, %v3231
    %v3367 = vmul.f32 %v2141, %v3235
    %v3368 = vmul.f32 %v2281, %v3239
    %v3369 = vmul.f32 %v2283, %v3243
    %v3370 = vmul.f32 %v2423, %v3247
    %v3371 = vmul.f32 %v2425, %v3251
    %v3372 = vmul.f32 %v2565, %v3255
    %v3373 = vmul.f32 %v2567, %v3259
    %v3374 = vmul.f32 %v2707, %v3263
    %v3375 = vmul.f32 %v2709, %v3267
    %v3376 = vmul.f32 %v2143, %v3231
    %v3377 = vmul.f32 %v2145, %v3235
    %v3378 = vmul.f32 %v2285, %v3239
    %v3379 = vmul.f32 %v2287, %v3243
    %v3380 = vmul.f32 %v2427, %v3247
    %v3381 = vmul.f32 %v2429, %v3251
    %v3382 = vmul.f32 %v2569, %v3255
    %v3383 = vmul.f32 %v2571, %v3259
    %v3384 = vmul.f32 %v2711, %v3263
    %v3385 = vmul.f32 %v2713, %v3267
    %v3386 = vmul.f32 %v2149, %v3231
    %v3387 = vmul.f32 %v2151, %v3235
    %v3388 = vmul.f32 %v2291, %v3239
    %v3389 = vmul.f32 %v2293, %v3243
    %v3390 = vmul.f32 %v2433, %v3247
    %v3391 = vmul.f32 %v2435, %v3251
    %v3392 = vmul.f32 %v2575, %v3255
    %v3393 = vmul.f32 %v2577, %v3259
    %v3394 = vmul.f32 %v2717, %v3263
    %v3395 = vmul.f32 %v2719, %v3267
    %v3396 = vmul.f32 %v2153, %v3231
    %v3397 = vmul.f32 %v2155, %v3235
    %v3398 = vmul.f32 %v2295, %v3239
    %v3399 = vmul.f32 %v2297, %v3243
    %v3400 = vmul.f32 %v2437, %v3247
    %v3401 = vmul.f32 %v2439, %v3251
    %v3402 = vmul.f32 %v2579, %v3255
    %v3403 = vmul.f32 %v2581, %v3259
    %v3404 = vmul.f32 %v2721, %v3263
    %v3405 = vmul.f32 %v2723, %v3267
    %v3406 = vmul.f32 %v2159, %v3231
    %v3407 = vmul.f32 %v2161, %v3235
    %v3408 = vmul.f32 %v2301, %v3239
    %v3409 = vmul.f32 %v2303, %v3243
    %v3410 = vmul.f32 %v2443, %v3247
    %v3411 = vmul.f32 %v2445, %v3251
    %v3412 = vmul.f32 %v2585, %v3255
    %v3413 = vmul.f32 %v2587, %v3259
    %v3414 = vmul.f32 %v2727, %v3263
    %v3415 = vmul.f32 %v2729, %v3267
    %v3416 = vmul.f32 %v2163, %v3231
    %v3417 = vmul.f32 %v2165, %v3235
    %v3418 = vmul.f32 %v2305, %v3239
    %v3419 = vmul.f32 %v2307, %v3243
    %v3420 = vmul.f32 %v2447, %v3247
    %v3421 = vmul.f32 %v2449, %v3251
    %v3422 = vmul.f32 %v2589, %v3255
    %v3423 = vmul.f32 %v2591, %v3259
    %v3424 = vmul.f32 %v2731, %v3263
    %v3425 = vmul.f32 %v2733, %v3267
    %v3426 = vmul.f32 %v2169, %v3231
    %v3427 = vmul.f32 %v2171, %v3235
    %v3428 = vmul.f32 %v2311, %v3239
    %v3429 = vmul.f32 %v2313, %v3243
    %v3430 = vmul.f32 %v2453, %v3247
    %v3431 = vmul.f32 %v2455, %v3251
    %v3432 = vmul.f32 %v2595, %v3255
    %v3433 = vmul.f32 %v2597, %v3259
    %v3434 = vmul.f32 %v2737, %v3263
    %v3435 = vmul.f32 %v2739, %v3267
    %v3438 = vlaneseq
    %v3439 = vshrl.u32 %v3438, 7
    %v3440 = vsub.s32 0, %v3439
    %v3441 = vrot.slane %v3364, %v3440
    %v3442 = vlaneseq
    %v3443 = vshrl.u32 %v3442, 7
    %v3444 = vsub.s32 1, %v3443
    %v3445 = vrot.slane %v3364, %v3444
    %v3446 = vlaneseq
    %v3447 = vshrl.u32 %v3446, 7
    %v3448 = vsub.s32 2, %v3447
    %v3449 = vrot.slane %v3364, %v3448
    %v3450 = vlaneseq
    %v3451 = vshrl.u32 %v3450, 7
    %v3452 = vsub.s32 3, %v3451
    %v3453 = vrot.slane %v3364, %v3452
    %v3454 = vlaneseq
    %v3455 = vshrl.u32 %v3454, 7
    %v3456 = vsub.s32 4, %v3455
    %v3457 = vrot.slane %v3364, %v3456
    %v3458 = vlaneseq
    %v3459 = vshrl.u32 %v3458, 7
    %v3460 = vsub.s32 5, %v3459
    %v3461 = vrot.slane %v3364, %v3460
    %v3462 = vlaneseq
    %v3463 = vshrl.u32 %v3462, 7
    %v3464 = vsub.s32 6, %v3463
    %v3465 = vrot.slane %v3364, %v3464
    %v3466 = vlaneseq
    %v3467 = vshrl.u32 %v3466, 7
    %v3468 = vsub.s32 7, %v3467
    %v3469 = vrot.slane %v3364, %v3468
    %v3470 = vlaneseq
    %v3471 = vshrl.u32 %v3470, 7
    %v3472 = vsub.s32 0, %v3471
    %v3473 = vrot.slane %v3365, %v3472
    %v3474 = vlaneseq
    %v3475 = vshrl.u32 %v3474, 7
    %v3476 = vsub.s32 1, %v3475
    %v3477 = vrot.slane %v3365, %v3476
    %v3488 = vadd.f32 %v3366, %v3441
    %v3489 = vadd.f32 %v3367, %v3445
    %v3490 = vadd.f32 %v3368, %v3449
    %v3491 = vadd.f32 %v3369, %v3453
    %v3492 = vadd.f32 %v3370, %v3457
    %v3493 = vadd.f32 %v3371, %v3461
    %v3494 = vadd.f32 %v3372, %v3465
    %v3495 = vadd.f32 %v3373, %v3469
    %v3496 = vadd.f32 %v3374, %v3473
    %v3497 = vadd.f32 %v3375, %v3477
    %v3498 = vadd.f32 %v3376, %v3441
    %v3499 = vadd.f32 %v3377, %v3445
    %v3500 = vadd.f32 %v3378, %v3449
    %v3501 = vadd.f32 %v3379, %v3453
    %v3502 = vadd.f32 %v3380, %v3457
    %v3503 = vadd.f32 %v3381, %v3461
    %v3504 = vadd.f32 %v3382, %v3465
    %v3505 = vadd.f32 %v3383, %v3469
    %v3506 = vadd.f32 %v3384, %v3473
    %v3507 = vadd.f32 %v3385, %v3477
    %v3508 = vadd.f32 %v3386, %v3441
    %v3509 = vadd.f32 %v3387, %v3445
    %v3510 = vadd.f32 %v3388, %v3449
    %v3511 = vadd.f32 %v3389, %v3453
    %v3512 = vadd.f32 %v3390, %v3457
    %v3513 = vadd.f32 %v3391, %v3461
    %v3514 = vadd.f32 %v3392, %v3465
    %v3515 = vadd.f32 %v3393, %v3469
    %v3516 = vadd.f32 %v3394, %v3473
    %v3517 = vadd.f32 %v3395, %v3477
    %v3518 = vadd.f32 %v3396, %v3441
    %v3519 = vadd.f32 %v3397, %v3445
    %v3520 = vadd.f32 %v3398, %v3449
    %v3521 = vadd.f32 %v3399, %v3453
    %v3522 = vadd.f32 %v3400, %v3457
    %v3523 = vadd.f32 %v3401, %v3461
    %v3524 = vadd.f32 %v3402, %v3465
    %v3525 = vadd.f32 %v3403, %v3469
    %v3526 = vadd.f32 %v3404, %v3473
    %v3527 = vadd.f32 %v3405, %v3477
    %v3528 = vadd.f32 %v3406, %v3441
    %v3529 = vadd.f32 %v3407, %v3445
    %v3530 = vadd.f32 %v3408, %v3449
    %v3531 = vadd.f32 %v3409, %v3453
    %v3532 = vadd.f32 %v3410, %v3457
    %v3533 = vadd.f32 %v3411, %v3461
    %v3534 = vadd.f32 %v3412, %v3465
    %v3535 = vadd.f32 %v3413, %v3469
    %v3536 = vadd.f32 %v3414, %v3473
    %v3537 = vadd.f32 %v3415, %v3477
    %v3538 = vadd.f32 %v3416, %v3441
    %v3539 = vadd.f32 %v3417, %v3445
    %v3540 = vadd.f32 %v3418, %v3449
    %v3541 = vadd.f32 %v3419, %v3453
    %v3542 = vadd.f32 %v3420, %v3457
    %v3543 = vadd.f32 %v3421, %v3461
    %v3544 = vadd.f32 %v3422, %v3465
    %v3545 = vadd.f32 %v3423, %v3469
    %v3546 = vadd.f32 %v3424, %v3473
    %v3547 = vadd.f32 %v3425, %v3477
    %v3548 = vadd.f32 %v3426, %v3441
    %v3549 = vadd.f32 %v3427, %v3445
    %v3550 = vadd.f32 %v3428, %v3449
    %v3551 = vadd.f32 %v3429, %v3453
    %v3552 = vadd.f32 %v3430, %v3457
    %v3553 = vadd.f32 %v3431, %v3461
    %v3554 = vadd.f32 %v3432, %v3465
    %v3555 = vadd.f32 %v3433, %v3469
    %v3556 = vadd.f32 %v3434, %v3473
    %v3557 = vadd.f32 %v3435, %v3477
    %3558 = vst [vmem:[#allocation10] sm:$0xff] %v3488
    %3559 = vst [vmem:[#allocation10 + $0x8] sm:$0xff] %v3489
    %3560 = vst [vmem:[#allocation10 + $0x10] sm:$0xff] %v3490
    %3561 = vst [vmem:[#allocation10 + $0x18] sm:$0xff] %v3491
    %3562 = vst [vmem:[#allocation10 + $0x20] sm:$0xff] %v3492
    %3563 = vst [vmem:[#allocation10 + $0x28] sm:$0xff] %v3493
    %3564 = vst [vmem:[#allocation10 + $0x30] sm:$0xff] %v3494
    %3565 = vst [vmem:[#allocation10 + $0x38] sm:$0xff] %v3495
    %3566 = vst [vmem:[#allocation10 + $0x40] sm:$0xff] %v3496
    %3567 = vst [vmem:[#allocation10 + $0x48] sm:$0xff] %v3497
    %3568 = vst [vmem:[#allocation10 + $0x50] sm:$0xff] %v3498
    %3569 = vst [vmem:[#allocation10 + $0x58] sm:$0xff] %v3499
    %3570 = vst [vmem:[#allocation10 + $0x60] sm:$0xff] %v3500
    %3571 = vst [vmem:[#allocation10 + $0x68] sm:$0xff] %v3501
    %3572 = vst [vmem:[#allocation10 + $0x70] sm:$0xff] %v3502
    %3573 = vst [vmem:[#allocation10 + $0x78] sm:$0xff] %v3503
    %3574 = vst [vmem:[#allocation10 + $0x80] sm:$0xff] %v3504
    %3575 = vst [vmem:[#allocation10 + $0x88] sm:$0xff] %v3505
    %3576 = vst [vmem:[#allocation10 + $0x90] sm:$0xff] %v3506
    %3577 = vst [vmem:[#allocation10 + $0x98] sm:$0xff] %v3507
    %3578 = vst [vmem:[#allocation10 + $0xa0] sm:$0xff] %v3508
    %3579 = vst [vmem:[#allocation10 + $0xa8] sm:$0xff] %v3509
    %3580 = vst [vmem:[#allocation10 + $0xb0] sm:$0xff] %v3510
    %3581 = vst [vmem:[#allocation10 + $0xb8] sm:$0xff] %v3511
    %3582 = vst [vmem:[#allocation10 + $0xc0] sm:$0xff] %v3512
    %3583 = vst [vmem:[#allocation10 + $0xc8] sm:$0xff] %v3513
    %3584 = vst [vmem:[#allocation10 + $0xd0] sm:$0xff] %v3514
    %3585 = vst [vmem:[#allocation10 + $0xd8] sm:$0xff] %v3515
    %3586 = vst [vmem:[#allocation10 + $0xe0] sm:$0xff] %v3516
    %3587 = vst [vmem:[#allocation10 + $0xe8] sm:$0xff] %v3517
    %3588 = vst [vmem:[#allocation10 + $0xf0] sm:$0xff] %v3518
    %3589 = vst [vmem:[#allocation10 + $0xf8] sm:$0xff] %v3519
    %3590 = vst [vmem:[#allocation10 + $0x100] sm:$0xff] %v3520
    %3591 = vst [vmem:[#allocation10 + $0x108] sm:$0xff] %v3521
    %3592 = vst [vmem:[#allocation10 + $0x110] sm:$0xff] %v3522
    %3593 = vst [vmem:[#allocation10 + $0x118] sm:$0xff] %v3523
    %3594 = vst [vmem:[#allocation10 + $0x120] sm:$0xff] %v3524
    %3595 = vst [vmem:[#allocation10 + $0x128] sm:$0xff] %v3525
    %3596 = vst [vmem:[#allocation10 + $0x130] sm:$0xff] %v3526
    %3597 = vst [vmem:[#allocation10 + $0x138] sm:$0xff] %v3527
    %3598 = vst [vmem:[#allocation10 + $0x140] sm:$0xff] %v3528
    %3599 = vst [vmem:[#allocation10 + $0x148] sm:$0xff] %v3529
    %3600 = vst [vmem:[#allocation10 + $0x150] sm:$0xff] %v3530
    %3601 = vst [vmem:[#allocation10 + $0x158] sm:$0xff] %v3531
    %3602 = vst [vmem:[#allocation10 + $0x160] sm:$0xff] %v3532
    %3603 = vst [vmem:[#allocation10 + $0x168] sm:$0xff] %v3533
    %3604 = vst [vmem:[#allocation10 + $0x170] sm:$0xff] %v3534
    %3605 = vst [vmem:[#allocation10 + $0x178] sm:$0xff] %v3535
    %3606 = vst [vmem:[#allocation10 + $0x180] sm:$0xff] %v3536
    %3607 = vst [vmem:[#allocation10 + $0x188] sm:$0xff] %v3537
    %3608 = vst [vmem:[#allocation10 + $0x190] sm:$0xff] %v3538
    %3609 = vst [vmem:[#allocation10 + $0x198] sm:$0xff] %v3539
    %3610 = vst [vmem:[#allocation10 + $0x1a0] sm:$0xff] %v3540
    %3611 = vst [vmem:[#allocation10 + $0x1a8] sm:$0xff] %v3541
    %3612 = vst [vmem:[#allocation10 + $0x1b0] sm:$0xff] %v3542
    %3613 = vst [vmem:[#allocation10 + $0x1b8] sm:$0xff] %v3543
    %3614 = vst [vmem:[#allocation10 + $0x1c0] sm:$0xff] %v3544
    %3615 = vst [vmem:[#allocation10 + $0x1c8] sm:$0xff] %v3545
    %3616 = vst [vmem:[#allocation10 + $0x1d0] sm:$0xff] %v3546
    %3617 = vst [vmem:[#allocation10 + $0x1d8] sm:$0xff] %v3547
    %3618 = vst [vmem:[#allocation10 + $0x1e0] sm:$0x1] %v3548
    %3619 = vst [vmem:[#allocation10 + $0x1e8] sm:$0x1] %v3549
    %3620 = vst [vmem:[#allocation10 + $0x1f0] sm:$0x1] %v3550
    %3621 = vst [vmem:[#allocation10 + $0x1f8] sm:$0x1] %v3551
    %3622 = vst [vmem:[#allocation10 + $0x200] sm:$0x1] %v3552
    %3623 = vst [vmem:[#allocation10 + $0x208] sm:$0x1] %v3553
    %3624 = vst [vmem:[#allocation10 + $0x210] sm:$0x1] %v3554
    %3625 = vst [vmem:[#allocation10 + $0x218] sm:$0x1] %v3555
    %3626 = vst [vmem:[#allocation10 + $0x220] sm:$0x1] %v3556
    %3627 = vst [vmem:[#allocation10 + $0x228] sm:$0x1] %v3557
    // Predicated region
    $region34: #{tpu_custom_call.1} parent=1 // pred_check
      _
    $region35: #{tpu_custom_call.1} parent=1 // pred_check_branch
      %3629 = sbr.rel (0) target = $region37
    $region36: #{tpu_custom_call.1} parent=1 // pred_region
      %s3631 = ssub.s32 8960, 8960
      %3632 = vsyncadd [#allocation4], %s3631
      %s3633 = sshll.u32 [#allocation10], 4
      %s3634 = int_to_ptr.vmem [resolvable:$true] %s3633
      %3639 = dma.vmem_to_hbm [thread:$0]  %s3634, 8960, %s4, [#allocation4], 1280, 1280, 80
    $region37: #{tpu_custom_call.1} parent=1 // pred_fallthru
      _
    // Predicated region
    $region38: #{tpu_custom_call.1} parent=1 // pred_check
      _
    $region39: #{tpu_custom_call.1} parent=1 // pred_check_branch
      %3641 = sbr.rel (0) target = $region41
    $region40: #{tpu_custom_call.1} parent=1 // pred_region
      %3642 = dma.done [#allocation4], 8960
    $region41: #{tpu_custom_call.1} parent=1 // pred_fallthru
      _
    %3643 = vsyncpa [#allocation3], 1
    %3644 = vsyncpa [#allocation6], 1
    %3645 = vsyncpa [#allocation9], 1
    %3646 = vsyncpa [#allocation4], 1

</llo_original>
